<compile_context>
chip_gen: v7x
topology: tpu7x:2x2x1
jax: 0.10.0
libtpu: 0.0.40
codegen_flags: <defaults>
</compile_context>

<pallas_src>
import functools

import jax
import jax.numpy as jnp
from jax import lax
from jax.experimental import pallas as pl
from jax.experimental.pallas import tpu as pltpu


def _round_up(x, m):
    return (x + m - 1) // m * m


def _conv_mxu_kernel(x_lo_ref, x_hi_ref, w_ref, b_ref, o_ref, xs_ref, acc_ref,
                     *, KH, KW, TH, HALO, Wpr):
    """One (batch, H-tile) grid step.  Flattened-row layout: lanes = rows*Wpr.

    x_lo_ref: (Cr, TH*Wpr)       padded-input rows [t*TH, (t+1)*TH)
    x_hi_ref: (Cr, HALO*Wpr)     next HALO rows (halo; only KH-1 of them used)
    w_ref:    (KH*KW, OCr, Cr)   VMEM weights, tap-major
    b_ref:    (OCr, 1) f32       bias
    o_ref:    (OCr, TH*Wpr)      output tile (flattened rows)
    xs_ref:   (Cr, (TH+HALO)*Wpr) scratch: tile + halo rows, contiguous
    acc_ref:  (OCr, TH*Wpr) f32  accumulator
    """
    THW = TH * Wpr

    # Assemble the rows this tile needs once per grid step (tile + halo).
    # TODO(synk): an overlapping-window (pl.Element) input BlockSpec would let
    #             us drop this VMEM->VMEM copy entirely.
    xs_ref[:, pl.ds(0, THW)] = x_lo_ref[...]
    xs_ref[:, pl.ds(THW, HALO * Wpr)] = x_hi_ref[...]

    # Tap (kh, kw): output flat index p reads input flat index p + kh*Wpr + kw,
    # so the rhs of the MXU contraction is one lane-shifted slice.
    for kh in range(KH):
        for kw in range(KW):
            rhs = xs_ref[:, pl.ds(kh * Wpr + kw, THW)]            # (Cr, THW)
            tap = jnp.dot(w_ref[kh * KW + kw], rhs,
                          preferred_element_type=jnp.float32)      # (OCr, THW)
            if kh == 0 and kw == 0:
                acc_ref[...] = tap
            else:
                acc_ref[...] += tap

    o_ref[...] = (acc_ref[...] + b_ref[...]).astype(o_ref.dtype)


def conv2d_nchw(x, weight, bias, padding, *, tile_h=None):
    """nn.Conv2d (stride=1, dilation=1, groups=1, zero padding) via Pallas.

    x: (B, C, H, W) NCHW, weight: (OC, C, KH, KW) OIHW, bias: (OC,).
    Returns (B, OC, HO, WO) NCHW.
    """
    ph, pw = padding
    B, C, H, W = x.shape
    OC, _, KH, KW = weight.shape
    HO = H + 2 * ph - KH + 1
    WO = W + 2 * pw - KW + 1
    assert HO > 0 and WO > 0
    Wp = W + 2 * pw
    Wpr = _round_up(Wp, 16)              # makes TH*Wpr / HALO*Wpr multiples of 128
    Cr = _round_up(C, 8)
    OCr = _round_up(OC, 8)
    HALO = _round_up(KH, 8)              # halo rows fetched per tile (>= KH-1)
    dt = x.dtype
    isz = jnp.dtype(dt).itemsize

    # --- generation-aware tile-height pick --------------------------------
    try:
        cap = int(getattr(pltpu.get_tpu_info(), "vmem_capacity_bytes", 64 << 20))
    except Exception:
        cap = 64 << 20                   # conservative fallback (v7x per-TC VMEM)
    if tile_h is None:
        budget = int(cap * 0.55)
        const = (KH * KW * OCr * Cr * isz           # weights
                 + 3 * Cr * HALO * Wpr * isz        # halo double-buffer + scratch
                 + (1 << 20))                       # slack
        per_row = Wpr * (4 * Cr * isz               # x_lo (x2 buffers) + xs + rhs temp
                         + 2 * OCr * isz            # output (x2 buffers)
                         + 2 * OCr * 4)             # f32 acc scratch + dot temp
        tile_h = max(HALO, (budget - const) // per_row)
    TH = max(HALO, min(_round_up(HO, HALO),
                       _round_up(min(int(tile_h), 4096), HALO)))

    NT = pl.cdiv(HO, TH)
    Hp = NT * TH + HALO                  # +HALO rows so the halo view is in-bounds
    THW = TH * Wpr

    # Zero padding (spatial + channel alignment) and row flattening.
    # TODO(synk): the pad is one extra HBM round trip of the input; masked
    #             first/last taps inside the kernel would remove it.
    x_p = jnp.pad(x, ((0, 0), (0, Cr - C), (ph, Hp - H - ph), (pw, Wpr - Wp + pw)))
    x_flat = x_p.reshape(B, Cr, Hp * Wpr)

    w_p = jnp.pad(weight, ((0, OCr - OC), (0, Cr - C), (0, 0), (0, 0)))
    w_taps = w_p.transpose(2, 3, 0, 1).reshape(KH * KW, OCr, Cr).astype(dt)
    b_p = jnp.pad(bias, (0, OCr - OC)).astype(jnp.float32).reshape(OCr, 1)

    kernel = functools.partial(_conv_mxu_kernel,
                               KH=KH, KW=KW, TH=TH, HALO=HALO, Wpr=Wpr)

    out_flat = pl.pallas_call(
        kernel,
        out_shape=jax.ShapeDtypeStruct((B, OCr, NT * THW), dt),
        grid=(B, NT),
        in_specs=[
            # main tile: TH flattened rows
            pl.BlockSpec((None, Cr, THW), lambda b, t: (b, 0, t)),
            # halo: only HALO rows (not a full second tile)
            pl.BlockSpec((None, Cr, HALO * Wpr),
                         lambda b, t: (b, 0, (t + 1) * (TH // HALO))),
            # VMEM-resident weights and bias (constant across the grid)
            pl.BlockSpec((KH * KW, OCr, Cr), lambda b, t: (0, 0, 0)),
            pl.BlockSpec((OCr, 1), lambda b, t: (0, 0)),
        ],
        out_specs=pl.BlockSpec((None, OCr, THW), lambda b, t: (b, 0, t)),
        scratch_shapes=[
            pltpu.VMEM((Cr, (TH + HALO) * Wpr), dt),
            pltpu.VMEM((OCr, THW), jnp.float32),
        ],
        compiler_params=pltpu.CompilerParams(
            # TODO(synk): consider pltpu.CORE_PARALLEL on the leading axis for
            #             explicit 2-TensorCore sharding on v7x.
            dimension_semantics=("parallel", "parallel"),
            vmem_limit_bytes=int(cap * 0.75)),
    )(x_flat, x_flat, w_taps, b_p)

    out = out_flat.reshape(B, OCr, NT * TH, Wpr)
    return out[:, :OC, :HO, :WO]


def patch_conv2d_forward(x, weight, bias, padding=(1, 1), splits=4, *, tile_h=None):
    """Faithful port of PatchConv2d.forward (NCHW in / NCHW out)."""
    b, c, h, w = x.shape
    ph, pw = padding
    if c * h * w >= (1 << 30):
        # Large-input path (matches the module): split H into `splits` patches,
        # exchange ph halo rows between neighbours, run the conv with zero
        # height-padding, re-interleave.  (As in the original module, this only
        # reproduces a plain conv exactly when KH == 2*ph + 1.)
        assert h % splits == 0
        xp = x.reshape(b, c, splits, h // splits, w).transpose(0, 2, 1, 3, 4)
        x_padded = jnp.pad(xp, ((0, 0), (0, 0), (0, 0), (ph, ph), (0, 0)))
        if ph > 0:
            x_padded = x_padded.at[:, 1:, :, :ph].set(xp[:, :-1, :, -ph:])
            x_padded = x_padded.at[:, :-1, :, -ph:].set(xp[:, 1:, :, :ph])
        x_padded = x_padded.reshape(b * splits, c, -1, w)
        out = conv2d_nchw(x_padded, weight, bias, (0, pw), tile_h=tile_h)
        _, oc, oh, ow = out.shape
        out = out.reshape(b, splits, oc, oh, ow).transpose(0, 2, 1, 3, 4)
        return out.reshape(b, oc, -1, ow)
    return conv2d_nchw(x, weight, bias, padding, tile_h=tile_h)


def _ref_conv(x, w, b, padding):
    out = lax.conv_general_dilated(
        x, w, window_strides=(1, 1),
        padding=((padding[0], padding[0]), (padding[1], padding[1])),
        dimension_numbers=("NCHW", "OIHW", "NCHW"),
        precision=lax.Precision.HIGHEST)
    return out + b[None, :, None, None]


if __name__ == "__main__":
    key = jax.random.PRNGKey(0)
    k1, k2, k3, k4, k5, k6 = jax.random.split(key, 6)

    # Integer-valued inputs => the convolution is exact in every matmul
    # precision mode, so the comparison validates indexing/semantics tightly.

    # --- Test 1: module-level forward, Conv2d(4, 8, 3, padding=1), 16x16 ----
    B, C, H, W = 2, 4, 16, 16
    OC, KH, KW = 8, 3, 3
    pad = (1, 1)
    x = jax.random.randint(k1, (B, C, H, W), -3, 4).astype(jnp.float32)
    wgt = jax.random.randint(k2, (OC, C, KH, KW), -2, 3).astype(jnp.float32)
    bia = jax.random.randint(k3, (OC,), -2, 3).astype(jnp.float32)

    out = patch_conv2d_forward(x, wgt, bia, padding=pad, splits=4)
    out = jax.block_until_ready(out)
    ref = _ref_conv(x, wgt, bia, pad)
    assert out.shape == (B, OC, H, W), out.shape
    assert jnp.allclose(out, ref, atol=1e-3, rtol=1e-3), "mismatch (default tiling)"

    # --- Test 2: multi-tile halo path, Conv2d(16, 16, 3, padding=1), 24x20 --
    B2, C2, H2, W2 = 1, 16, 24, 20
    OC2 = 16
    x2 = jax.random.randint(k4, (B2, C2, H2, W2), -3, 4).astype(jnp.float32)
    w2 = jax.random.randint(k5, (OC2, C2, KH, KW), -2, 3).astype(jnp.float32)
    b2 = jax.random.randint(k6, (OC2,), -2, 3).astype(jnp.float32)

    out2 = conv2d_nchw(x2, w2, b2, pad, tile_h=8)   # forces NT=3 -> halo exercised
    out2 = jax.block_until_ready(out2)
    ref2 = _ref_conv(x2, w2, b2, pad)
    assert out2.shape == ref2.shape, (out2.shape, ref2.shape)
    assert jnp.allclose(out2, ref2, atol=1e-3, rtol=1e-3), "mismatch (tiled path)"

    print("KERNEL_OK")
</pallas_src>

<mosaic_0001>
module attributes {stable_mosaic.version = 11 : i64} {
  func.func @_conv_mxu_kernel(%arg0: i32, %arg1: i32, %arg2: memref<1x8x512xf32, #tpu.memory_space<vmem>>, %arg3: memref<1x8x256xf32, #tpu.memory_space<vmem>>, %arg4: memref<9x8x8xf32, #tpu.memory_space<vmem>>, %arg5: memref<8x1xf32, #tpu.memory_space<vmem>>, %arg6: memref<1x8x512xf32, #tpu.memory_space<vmem>>, %arg7: memref<8x768xf32, #tpu.memory_space<vmem>>, %arg8: memref<8x512xf32, #tpu.memory_space<vmem>>) attributes {dimension_semantics = [#tpu.dimension_semantics<parallel>, #tpu.dimension_semantics<parallel>], iteration_bounds = array<i64: 2, 1>, scalar_prefetch = 0 : i64, scratch_operands = 2 : i64, tpu.core_type = #tpu.core_type<tc>, window_params = [{transform_indices = @transform_0, window_bounds = array<i64: 1, 8, 512>}, {transform_indices = @transform_1, window_bounds = array<i64: 1, 8, 256>}, {pipeline_mode = #tpu.pipeline_mode<synchronous>, transform_indices = @transform_2, window_bounds = array<i64: 9, 8, 8>}, {pipeline_mode = #tpu.pipeline_mode<synchronous>, transform_indices = @transform_3, window_bounds = array<i64: 8, 1>}, {transform_indices = @transform_4, window_bounds = array<i64: 1, 8, 512>}]} {
    %c0 = arith.constant 0 : index
    %c0_0 = arith.constant 0 : index
    %c0_1 = arith.constant 0 : index
    %0 = vector.load %arg2[%c0, %c0_0, %c0_1] : memref<1x8x512xf32, #tpu.memory_space<vmem>>, vector<1x8x512xf32>
    %1 = vector.shape_cast %0 : vector<1x8x512xf32> to vector<8x512xf32>
    %c0_2 = arith.constant 0 : index
    %c0_3 = arith.constant 0 : index
    %2 = vector.load %arg7[%c0_2, %c0_3] : memref<8x768xf32, #tpu.memory_space<vmem>>, vector<8x512xf32>
    tpu.vector_store %arg7[%c0_2, %c0_3], %1 {strides = array<i32>} : memref<8x768xf32, #tpu.memory_space<vmem>>, vector<8x512xf32>,
    %c0_4 = arith.constant 0 : index
    %c0_5 = arith.constant 0 : index
    %c0_6 = arith.constant 0 : index
    %3 = vector.load %arg3[%c0_4, %c0_5, %c0_6] : memref<1x8x256xf32, #tpu.memory_space<vmem>>, vector<1x8x256xf32>
    %4 = vector.shape_cast %3 : vector<1x8x256xf32> to vector<8x256xf32>
    %c0_7 = arith.constant 0 : index
    %c512 = arith.constant 512 : index
    %5 = vector.load %arg7[%c0_7, %c512] : memref<8x768xf32, #tpu.memory_space<vmem>>, vector<8x256xf32>
    tpu.vector_store %arg7[%c0_7, %c512], %4 {strides = array<i32>} : memref<8x768xf32, #tpu.memory_space<vmem>>, vector<8x256xf32>,
    %c0_8 = arith.constant 0 : index
    %c0_9 = arith.constant 0 : index
    %6 = vector.load %arg7[%c0_8, %c0_9] : memref<8x768xf32, #tpu.memory_space<vmem>>, vector<8x512xf32>
    %c0_10 = arith.constant 0 : index
    %c0_11 = arith.constant 0 : index
    %c0_12 = arith.constant 0 : index
    %7 = vector.load %arg4[%c0_10, %c0_11, %c0_12] : memref<9x8x8xf32, #tpu.memory_space<vmem>>, vector<1x8x8xf32>
    %8 = vector.shape_cast %7 : vector<1x8x8xf32> to vector<8x8xf32>
    %cst = arith.constant dense<0.000000e+00> : vector<8x512xf32>
    %9 = tpu.matmul %8, %6, %cst {dimension_numbers = #tpu.dot_dimension_numbers<[1], [0], [0], [1], [0, 0, 1, 1], [], []>} : vector<8x8xf32>, vector<8x512xf32>, vector<8x512xf32> -> vector<8x512xf32>
    %c0_13 = arith.constant 0 : index
    %c0_14 = arith.constant 0 : index
    %10 = vector.load %arg8[%c0_13, %c0_14] : memref<8x512xf32, #tpu.memory_space<vmem>>, vector<8x512xf32>
    tpu.vector_store %arg8[%c0_13, %c0_14], %9 {strides = array<i32>} : memref<8x512xf32, #tpu.memory_space<vmem>>, vector<8x512xf32>,
    %c0_15 = arith.constant 0 : index
    %c1 = arith.constant 1 : index
    %11 = vector.load %arg7[%c0_15, %c1] : memref<8x768xf32, #tpu.memory_space<vmem>>, vector<8x512xf32>
    %c1_16 = arith.constant 1 : index
    %c0_17 = arith.constant 0 : index
    %c0_18 = arith.constant 0 : index
    %12 = vector.load %arg4[%c1_16, %c0_17, %c0_18] : memref<9x8x8xf32, #tpu.memory_space<vmem>>, vector<1x8x8xf32>
    %13 = vector.shape_cast %12 : vector<1x8x8xf32> to vector<8x8xf32>
    %cst_19 = arith.constant dense<0.000000e+00> : vector<8x512xf32>
    %14 = tpu.matmul %13, %11, %cst_19 {dimension_numbers = #tpu.dot_dimension_numbers<[1], [0], [0], [1], [0, 0, 1, 1], [], []>} : vector<8x8xf32>, vector<8x512xf32>, vector<8x512xf32> -> vector<8x512xf32>
    %c0_20 = arith.constant 0 : index
    %c0_21 = arith.constant 0 : index
    %15 = vector.load %arg8[%c0_20, %c0_21] : memref<8x512xf32, #tpu.memory_space<vmem>>, vector<8x512xf32>
    %16 = arith.addf %15, %14 : vector<8x512xf32>
    %c0_22 = arith.constant 0 : index
    %c0_23 = arith.constant 0 : index
    %17 = vector.load %arg8[%c0_22, %c0_23] : memref<8x512xf32, #tpu.memory_space<vmem>>, vector<8x512xf32>
    tpu.vector_store %arg8[%c0_22, %c0_23], %16 {strides = array<i32>} : memref<8x512xf32, #tpu.memory_space<vmem>>, vector<8x512xf32>,
    %c0_24 = arith.constant 0 : index
    %c2 = arith.constant 2 : index
    %18 = vector.load %arg7[%c0_24, %c2] : memref<8x768xf32, #tpu.memory_space<vmem>>, vector<8x512xf32>
    %c2_25 = arith.constant 2 : index
    %c0_26 = arith.constant 0 : index
    %c0_27 = arith.constant 0 : index
    %19 = vector.load %arg4[%c2_25, %c0_26, %c0_27] : memref<9x8x8xf32, #tpu.memory_space<vmem>>, vector<1x8x8xf32>
    %20 = vector.shape_cast %19 : vector<1x8x8xf32> to vector<8x8xf32>
    %cst_28 = arith.constant dense<0.000000e+00> : vector<8x512xf32>
    %21 = tpu.matmul %20, %18, %cst_28 {dimension_numbers = #tpu.dot_dimension_numbers<[1], [0], [0], [1], [0, 0, 1, 1], [], []>} : vector<8x8xf32>, vector<8x512xf32>, vector<8x512xf32> -> vector<8x512xf32>
    %c0_29 = arith.constant 0 : index
    %c0_30 = arith.constant 0 : index
    %22 = vector.load %arg8[%c0_29, %c0_30] : memref<8x512xf32, #tpu.memory_space<vmem>>, vector<8x512xf32>
    %23 = arith.addf %22, %21 : vector<8x512xf32>
    %c0_31 = arith.constant 0 : index
    %c0_32 = arith.constant 0 : index
    %24 = vector.load %arg8[%c0_31, %c0_32] : memref<8x512xf32, #tpu.memory_space<vmem>>, vector<8x512xf32>
    tpu.vector_store %arg8[%c0_31, %c0_32], %23 {strides = array<i32>} : memref<8x512xf32, #tpu.memory_space<vmem>>, vector<8x512xf32>,
    %c0_33 = arith.constant 0 : index
    %c32 = arith.constant 32 : index
    %25 = vector.load %arg7[%c0_33, %c32] : memref<8x768xf32, #tpu.memory_space<vmem>>, vector<8x512xf32>
    %c3 = arith.constant 3 : index
    %c0_34 = arith.constant 0 : index
    %c0_35 = arith.constant 0 : index
    %26 = vector.load %arg4[%c3, %c0_34, %c0_35] : memref<9x8x8xf32, #tpu.memory_space<vmem>>, vector<1x8x8xf32>
    %27 = vector.shape_cast %26 : vector<1x8x8xf32> to vector<8x8xf32>
    %cst_36 = arith.constant dense<0.000000e+00> : vector<8x512xf32>
    %28 = tpu.matmul %27, %25, %cst_36 {dimension_numbers = #tpu.dot_dimension_numbers<[1], [0], [0], [1], [0, 0, 1, 1], [], []>} : vector<8x8xf32>, vector<8x512xf32>, vector<8x512xf32> -> vector<8x512xf32>
    %c0_37 = arith.constant 0 : index
    %c0_38 = arith.constant 0 : index
    %29 = vector.load %arg8[%c0_37, %c0_38] : memref<8x512xf32, #tpu.memory_space<vmem>>, vector<8x512xf32>
    %30 = arith.addf %29, %28 : vector<8x512xf32>
    %c0_39 = arith.constant 0 : index
    %c0_40 = arith.constant 0 : index
    %31 = vector.load %arg8[%c0_39, %c0_40] : memref<8x512xf32, #tpu.memory_space<vmem>>, vector<8x512xf32>
    tpu.vector_store %arg8[%c0_39, %c0_40], %30 {strides = array<i32>} : memref<8x512xf32, #tpu.memory_space<vmem>>, vector<8x512xf32>,
    %c0_41 = arith.constant 0 : index
    %c33 = arith.constant 33 : index
    %32 = vector.load %arg7[%c0_41, %c33] : memref<8x768xf32, #tpu.memory_space<vmem>>, vector<8x512xf32>
    %c4 = arith.constant 4 : index
    %c0_42 = arith.constant 0 : index
    %c0_43 = arith.constant 0 : index
    %33 = vector.load %arg4[%c4, %c0_42, %c0_43] : memref<9x8x8xf32, #tpu.memory_space<vmem>>, vector<1x8x8xf32>
    %34 = vector.shape_cast %33 : vector<1x8x8xf32> to vector<8x8xf32>
    %cst_44 = arith.constant dense<0.000000e+00> : vector<8x512xf32>
    %35 = tpu.matmul %34, %32, %cst_44 {dimension_numbers = #tpu.dot_dimension_numbers<[1], [0], [0], [1], [0, 0, 1, 1], [], []>} : vector<8x8xf32>, vector<8x512xf32>, vector<8x512xf32> -> vector<8x512xf32>
    %c0_45 = arith.constant 0 : index
    %c0_46 = arith.constant 0 : index
    %36 = vector.load %arg8[%c0_45, %c0_46] : memref<8x512xf32, #tpu.memory_space<vmem>>, vector<8x512xf32>
    %37 = arith.addf %36, %35 : vector<8x512xf32>
    %c0_47 = arith.constant 0 : index
    %c0_48 = arith.constant 0 : index
    %38 = vector.load %arg8[%c0_47, %c0_48] : memref<8x512xf32, #tpu.memory_space<vmem>>, vector<8x512xf32>
    tpu.vector_store %arg8[%c0_47, %c0_48], %37 {strides = array<i32>} : memref<8x512xf32, #tpu.memory_space<vmem>>, vector<8x512xf32>,
    %c0_49 = arith.constant 0 : index
    %c34 = arith.constant 34 : index
    %39 = vector.load %arg7[%c0_49, %c34] : memref<8x768xf32, #tpu.memory_space<vmem>>, vector<8x512xf32>
    %c5 = arith.constant 5 : index
    %c0_50 = arith.constant 0 : index
    %c0_51 = arith.constant 0 : index
    %40 = vector.load %arg4[%c5, %c0_50, %c0_51] : memref<9x8x8xf32, #tpu.memory_space<vmem>>, vector<1x8x8xf32>
    %41 = vector.shape_cast %40 : vector<1x8x8xf32> to vector<8x8xf32>
    %cst_52 = arith.constant dense<0.000000e+00> : vector<8x512xf32>
    %42 = tpu.matmul %41, %39, %cst_52 {dimension_numbers = #tpu.dot_dimension_numbers<[1], [0], [0], [1], [0, 0, 1, 1], [], []>} : vector<8x8xf32>, vector<8x512xf32>, vector<8x512xf32> -> vector<8x512xf32>
    %c0_53 = arith.constant 0 : index
    %c0_54 = arith.constant 0 : index
    %43 = vector.load %arg8[%c0_53, %c0_54] : memref<8x512xf32, #tpu.memory_space<vmem>>, vector<8x512xf32>
    %44 = arith.addf %43, %42 : vector<8x512xf32>
    %c0_55 = arith.constant 0 : index
    %c0_56 = arith.constant 0 : index
    %45 = vector.load %arg8[%c0_55, %c0_56] : memref<8x512xf32, #tpu.memory_space<vmem>>, vector<8x512xf32>
    tpu.vector_store %arg8[%c0_55, %c0_56], %44 {strides = array<i32>} : memref<8x512xf32, #tpu.memory_space<vmem>>, vector<8x512xf32>,
    %c0_57 = arith.constant 0 : index
    %c64 = arith.constant 64 : index
    %46 = vector.load %arg7[%c0_57, %c64] : memref<8x768xf32, #tpu.memory_space<vmem>>, vector<8x512xf32>
    %c6 = arith.constant 6 : index
    %c0_58 = arith.constant 0 : index
    %c0_59 = arith.constant 0 : index
    %47 = vector.load %arg4[%c6, %c0_58, %c0_59] : memref<9x8x8xf32, #tpu.memory_space<vmem>>, vector<1x8x8xf32>
    %48 = vector.shape_cast %47 : vector<1x8x8xf32> to vector<8x8xf32>
    %cst_60 = arith.constant dense<0.000000e+00> : vector<8x512xf32>
    %49 = tpu.matmul %48, %46, %cst_60 {dimension_numbers = #tpu.dot_dimension_numbers<[1], [0], [0], [1], [0, 0, 1, 1], [], []>} : vector<8x8xf32>, vector<8x512xf32>, vector<8x512xf32> -> vector<8x512xf32>
    %c0_61 = arith.constant 0 : index
    %c0_62 = arith.constant 0 : index
    %50 = vector.load %arg8[%c0_61, %c0_62] : memref<8x512xf32, #tpu.memory_space<vmem>>, vector<8x512xf32>
    %51 = arith.addf %50, %49 : vector<8x512xf32>
    %c0_63 = arith.constant 0 : index
    %c0_64 = arith.constant 0 : index
    %52 = vector.load %arg8[%c0_63, %c0_64] : memref<8x512xf32, #tpu.memory_space<vmem>>, vector<8x512xf32>
    tpu.vector_store %arg8[%c0_63, %c0_64], %51 {strides = array<i32>} : memref<8x512xf32, #tpu.memory_space<vmem>>, vector<8x512xf32>,
    %c0_65 = arith.constant 0 : index
    %c65 = arith.constant 65 : index
    %53 = vector.load %arg7[%c0_65, %c65] : memref<8x768xf32, #tpu.memory_space<vmem>>, vector<8x512xf32>
    %c7 = arith.constant 7 : index
    %c0_66 = arith.constant 0 : index
    %c0_67 = arith.constant 0 : index
    %54 = vector.load %arg4[%c7, %c0_66, %c0_67] : memref<9x8x8xf32, #tpu.memory_space<vmem>>, vector<1x8x8xf32>
    %55 = vector.shape_cast %54 : vector<1x8x8xf32> to vector<8x8xf32>
    %cst_68 = arith.constant dense<0.000000e+00> : vector<8x512xf32>
    %56 = tpu.matmul %55, %53, %cst_68 {dimension_numbers = #tpu.dot_dimension_numbers<[1], [0], [0], [1], [0, 0, 1, 1], [], []>} : vector<8x8xf32>, vector<8x512xf32>, vector<8x512xf32> -> vector<8x512xf32>
    %c0_69 = arith.constant 0 : index
    %c0_70 = arith.constant 0 : index
    %57 = vector.load %arg8[%c0_69, %c0_70] : memref<8x512xf32, #tpu.memory_space<vmem>>, vector<8x512xf32>
    %58 = arith.addf %57, %56 : vector<8x512xf32>
    %c0_71 = arith.constant 0 : index
    %c0_72 = arith.constant 0 : index
    %59 = vector.load %arg8[%c0_71, %c0_72] : memref<8x512xf32, #tpu.memory_space<vmem>>, vector<8x512xf32>
    tpu.vector_store %arg8[%c0_71, %c0_72], %58 {strides = array<i32>} : memref<8x512xf32, #tpu.memory_space<vmem>>, vector<8x512xf32>,
    %c0_73 = arith.constant 0 : index
    %c66 = arith.constant 66 : index
    %60 = vector.load %arg7[%c0_73, %c66] : memref<8x768xf32, #tpu.memory_space<vmem>>, vector<8x512xf32>
    %c8 = arith.constant 8 : index
    %c0_74 = arith.constant 0 : index
    %c0_75 = arith.constant 0 : index
    %61 = vector.load %arg4[%c8, %c0_74, %c0_75] : memref<9x8x8xf32, #tpu.memory_space<vmem>>, vector<1x8x8xf32>
    %62 = vector.shape_cast %61 : vector<1x8x8xf32> to vector<8x8xf32>
    %cst_76 = arith.constant dense<0.000000e+00> : vector<8x512xf32>
    %63 = tpu.matmul %62, %60, %cst_76 {dimension_numbers = #tpu.dot_dimension_numbers<[1], [0], [0], [1], [0, 0, 1, 1], [], []>} : vector<8x8xf32>, vector<8x512xf32>, vector<8x512xf32> -> vector<8x512xf32>
    %c0_77 = arith.constant 0 : index
    %c0_78 = arith.constant 0 : index
    %64 = vector.load %arg8[%c0_77, %c0_78] : memref<8x512xf32, #tpu.memory_space<vmem>>, vector<8x512xf32>
    %65 = arith.addf %64, %63 : vector<8x512xf32>
    %c0_79 = arith.constant 0 : index
    %c0_80 = arith.constant 0 : index
    %66 = vector.load %arg8[%c0_79, %c0_80] : memref<8x512xf32, #tpu.memory_space<vmem>>, vector<8x512xf32>
    tpu.vector_store %arg8[%c0_79, %c0_80], %65 {strides = array<i32>} : memref<8x512xf32, #tpu.memory_space<vmem>>, vector<8x512xf32>,
    %c0_81 = arith.constant 0 : index
    %c0_82 = arith.constant 0 : index
    %67 = vector.load %arg8[%c0_81, %c0_82] : memref<8x512xf32, #tpu.memory_space<vmem>>, vector<8x512xf32>
    %c0_83 = arith.constant 0 : index
    %c0_84 = arith.constant 0 : index
    %68 = vector.load %arg5[%c0_83, %c0_84] : memref<8x1xf32, #tpu.memory_space<vmem>>, vector<8x1xf32>
    %69 = vector.broadcast %68 : vector<8x1xf32> to vector<8x512xf32>
    %70 = arith.addf %67, %69 : vector<8x512xf32>
    %c0_85 = arith.constant 0 : index
    %c0_86 = arith.constant 0 : index
    %c0_87 = arith.constant 0 : index
    %71 = vector.load %arg6[%c0_85, %c0_86, %c0_87] : memref<1x8x512xf32, #tpu.memory_space<vmem>>, vector<1x8x512xf32>
    %72 = vector.shape_cast %71 : vector<1x8x512xf32> to vector<8x512xf32>
    %73 = vector.shape_cast %70 : vector<8x512xf32> to vector<1x8x512xf32>
    tpu.vector_store %arg6[%c0_85, %c0_86, %c0_87], %73 {strides = array<i32>} : memref<1x8x512xf32, #tpu.memory_space<vmem>>, vector<1x8x512xf32>,
    return
  }
  func.func @transform_0(%arg0: i32, %arg1: i32) -> (i32, i32, i32) {
    %c0_i32 = arith.constant 0 : i32
    %c0_i32_0 = arith.constant 0 : i32
    return %arg0, %c0_i32, %arg1 : i32, i32, i32
  }
  func.func @transform_1(%arg0: i32, %arg1: i32) -> (i32, i32, i32) {
    %c1_i32 = arith.constant 1 : i32
    %0 = arith.addi %arg1, %c1_i32 : i32
    %c2_i32 = arith.constant 2 : i32
    %1 = arith.muli %0, %c2_i32 : i32
    %c0_i32 = arith.constant 0 : i32
    %c0_i32_0 = arith.constant 0 : i32
    return %arg0, %c0_i32, %1 : i32, i32, i32
  }
  func.func @transform_2(%arg0: i32, %arg1: i32) -> (i32, i32, i32) {
    %c0_i32 = arith.constant 0 : i32
    %c0_i32_0 = arith.constant 0 : i32
    %c0_i32_1 = arith.constant 0 : i32
    %c0_i32_2 = arith.constant 0 : i32
    return %c0_i32, %c0_i32_0, %c0_i32_1 : i32, i32, i32
  }
  func.func @transform_3(%arg0: i32, %arg1: i32) -> (i32, i32) {
    %c0_i32 = arith.constant 0 : i32
    %c0_i32_0 = arith.constant 0 : i32
    %c0_i32_1 = arith.constant 0 : i32
    return %c0_i32, %c0_i32_0 : i32, i32
  }
  func.func @transform_4(%arg0: i32, %arg1: i32) -> (i32, i32, i32) {
    %c0_i32 = arith.constant 0 : i32
    %c0_i32_0 = arith.constant 0 : i32
    return %arg0, %c0_i32, %arg1 : i32, i32, i32
  }
}

</mosaic_0001>

<llo_original>
// kernel: tpu_custom_call.1
$region0: #{tpu_custom_call.1}
  #allocation0 [shape = 'u32[]', space=smem, size = 0x4, offset = 0x4, fixed_abs, tag = 'smem constant byte address 0x4 - core index']
  #allocation1 [shape = 'u32[144,128]{1,0:T(1,128)}', space=vmem, size = 0x12000, scoped, tag = 'internal scratch']
  #allocation2 [shape = 'f32[8,768]{1,0:T(8,128)}', space=vmem, size = 0x6000, scoped, tag = 'scratch operand']
  #allocation3 [shape = 'f32[8,512]{1,0:T(8,128)}', space=vmem, size = 0x4000, scoped, tag = 'scratch operand']
  %s0 = inlined_call_operand.vmem [shape: f32[2,8,768], index: 0, kind: input, shape index: {}]
  %s1 = inlined_call_operand.hbm [shape: f32[2,8,768], index: 1, kind: input, shape index: {}]
  %s2 = inlined_call_operand.vmem [shape: f32[9,8,8], index: 2, kind: input, shape index: {}]
  %s3 = inlined_call_operand.vmem [shape: f32[8,1], index: 3, kind: input, shape index: {}]
  %s4 = inlined_call_operand.hbm [shape: f32[2,8,512], index: 4, kind: output, shape index: {}]
  %s5 = sld [smem:[#allocation0]]
  $region53: #{tpu_custom_call.1} parent=0
    _
  %s7 = ssub.s32 1, %s5
  %s8 = scalar_select 0, %s7, %s5
  $region1: #{tpu_custom_call.1} parent=0
    #allocation4 [shape = 'u8[16384]{0}', space=vmem, size = 0x4000, scoped, tag = 'input window, operand 1']
    #allocation5 [shape = 's32[2]{0}', space=sflag, size = 0x8, scoped, tag = 'scoped memory for tpu_custom_call.1']
    #allocation6 [shape = 's32[2]{0}', space=sflag, size = 0x8, scoped, tag = 'scoped memory for tpu_custom_call.1']
    #allocation7 [shape = 'u8[32768]{0}', space=vmem, size = 0x8000, scoped, tag = 'output window, operand 0']
    %9 = vsyncpa [#allocation5], 0
    %s10 = scalar_lea.sflag [#allocation5], 1
    %11 = vsyncpa %s10, 0
    %12 = vsyncpa [#allocation6], 0
    %s13 = scalar_lea.sflag [#allocation6], 1
    %14 = vsyncpa %s13, 0
    loop: start=0, step=1, limit=4
    $region2: #{tpu_custom_call.1} parent=1 // loop_pre_header
      _
    $region3: #{tpu_custom_call.1} parent=1 // loop_header
      %s16 = sphi 0, %s20
      %p17 = scmp.ge.s32.totalorder %s16, 4
      %s23 = sphi 0, %s35
      %s24 = sphi 0, %s31
      %s25 = sphi 0, %s23
      %s26 = sphi 0, %s24
      %s27 = sphi 0, %s25
      %s28 = sphi 0, %s26
      %s40 = sphi 0, %s42
      %s43 = sphi 0, %s40
      %s44 = sphi 0, %s43
      %s60 = sphi 0, %s44
      %s72 = sphi 0, %s74
      %s75 = sphi 0, %s72
      %s76 = sphi 0, %s75
      %s92 = sphi 0, %s76
      %s96 = sphi 0, %s96
      %s98 = sphi 0, %s96
      %s99 = sphi 0, %s98
      %s113 = sphi 0, %s99
      %s117 = sphi 0, %s117
      %s119 = sphi 0, %s117
      %s120 = sphi 0, %s119
      %s134 = sphi 0, %s120
      %s142 = sphi 0, %s144
      %s145 = sphi 0, %s142
      %s146 = sphi 0, %s145
      %s162 = sphi 0, %s146
    $region4: #{tpu_custom_call.1} parent=1 // loop_header_branch
      %19 = sbr.rel (%p17) target = $region8
    $region5: #{tpu_custom_call.1} parent=1 // loop_body
      %s21 = ssub.s32 %s16, 1
      %s22 = ssub.s32 %s16, 2
      %s29 = sadd.s32 1, %s24
      %p30 = scmp.ge.s32.totalorder %s29, 1
      %s31 = scalar_select %p30, 0, %s29
      %s32 = sadd.s32 1, %s23
      %s33 = scalar_select %p30, %s32, %s23
      %p34 = scmp.ge.s32.totalorder %s33, 2
      %s35 = scalar_select %p34, 0, %s33
      %s36 = ssub.s32 %s23, %s35
      %s37 = ssub.s32 %s24, %s31
      %s38 = sor.u32 %s36, %s37
      %p39 = scmp.eq.s32.totalorder %s38, 0
      %s41 = sadd.s32 %s40, 1
      %s42 = scalar_select %p39, %s40, %s41
      %p45 = pneg %p39
      %p46 = scmp.eq.s32.totalorder %s16, 1
      %p47 = por %p45, %p46
      %p48 = scmp.ne.s32.totalorder %s40, %s43
      %p49 = scmp.eq.s32.totalorder %s16, 0
      %p50 = por %p48, %p49
      %p51 = scmp.ne.s32.totalorder %s40, %s43
      %p52 = scmp.eq.s32.totalorder %s21, 1
      %p53 = por %p51, %p52
      %p54 = scmp.ne.s32.totalorder %s43, %s44
      %p55 = scmp.eq.s32.totalorder %s21, 0
      %p56 = por %p54, %p55
      %p57 = scmp.ne.s32.totalorder %s43, %s44
      %p58 = scmp.eq.s32.totalorder %s22, 1
      %p59 = por %p57, %p58
      %p61 = scmp.ne.s32.totalorder %s44, %s60
      %p62 = scmp.eq.s32.totalorder %s22, 0
      %p63 = por %p61, %p62
      %s64 = sadd.s32 %s24, 1
      %s65 = smul.u32 %s64, 2
      %s66 = sadd.s32 %s31, 1
      %s67 = smul.u32 %s66, 2
      %s68 = ssub.s32 %s23, %s35
      %s69 = ssub.s32 %s65, %s67
      %s70 = sor.u32 %s68, %s69
      %p71 = scmp.eq.s32.totalorder %s70, 0
      %s73 = sadd.s32 %s72, 1
      %s74 = scalar_select %p71, %s72, %s73
      %p77 = pneg %p71
      %p78 = scmp.eq.s32.totalorder %s16, 1
      %p79 = por %p77, %p78
      %p80 = scmp.ne.s32.totalorder %s72, %s75
      %p81 = scmp.eq.s32.totalorder %s16, 0
      %p82 = por %p80, %p81
      %p83 = scmp.ne.s32.totalorder %s72, %s75
      %p84 = scmp.eq.s32.totalorder %s21, 1
      %p85 = por %p83, %p84
      %p86 = scmp.ne.s32.totalorder %s75, %s76
      %p87 = scmp.eq.s32.totalorder %s21, 0
      %p88 = por %p86, %p87
      %p89 = scmp.ne.s32.totalorder %s75, %s76
      %p90 = scmp.eq.s32.totalorder %s22, 1
      %p91 = por %p89, %p90
      %p93 = scmp.ne.s32.totalorder %s76, %s92
      %p94 = scmp.eq.s32.totalorder %s22, 0
      %p95 = por %p93, %p94
      %s97 = sadd.s32 %s96, 1
      %p100 = scmp.eq.s32.totalorder %s16, 1
      %p101 = scmp.ne.s32.totalorder %s96, %s98
      %p102 = scmp.eq.s32.totalorder %s16, 0
      %p103 = por %p101, %p102
      %p104 = scmp.ne.s32.totalorder %s96, %s98
      %p105 = scmp.eq.s32.totalorder %s21, 1
      %p106 = por %p104, %p105
      %p107 = scmp.ne.s32.totalorder %s98, %s99
      %p108 = scmp.eq.s32.totalorder %s21, 0
      %p109 = por %p107, %p108
      %p110 = scmp.ne.s32.totalorder %s98, %s99
      %p111 = scmp.eq.s32.totalorder %s22, 1
      %p112 = por %p110, %p111
      %p114 = scmp.ne.s32.totalorder %s99, %s113
      %p115 = scmp.eq.s32.totalorder %s22, 0
      %p116 = por %p114, %p115
      %s118 = sadd.s32 %s117, 1
      %p121 = scmp.eq.s32.totalorder %s16, 1
      %p122 = scmp.ne.s32.totalorder %s117, %s119
      %p123 = scmp.eq.s32.totalorder %s16, 0
      %p124 = por %p122, %p123
      %p125 = scmp.ne.s32.totalorder %s117, %s119
      %p126 = scmp.eq.s32.totalorder %s21, 1
      %p127 = por %p125, %p126
      %p128 = scmp.ne.s32.totalorder %s119, %s120
      %p129 = scmp.eq.s32.totalorder %s21, 0
      %p130 = por %p128, %p129
      %p131 = scmp.ne.s32.totalorder %s119, %s120
      %p132 = scmp.eq.s32.totalorder %s22, 1
      %p133 = por %p131, %p132
      %p135 = scmp.ne.s32.totalorder %s120, %s134
      %p136 = scmp.eq.s32.totalorder %s22, 0
      %p137 = por %p135, %p136
      %s138 = ssub.s32 %s23, %s35
      %s139 = ssub.s32 %s24, %s31
      %s140 = sor.u32 %s138, %s139
      %p141 = scmp.eq.s32.totalorder %s140, 0
      %s143 = sadd.s32 %s142, 1
      %s144 = scalar_select %p141, %s142, %s143
      %p147 = pneg %p141
      %p148 = scmp.eq.s32.totalorder %s16, 1
      %p149 = por %p147, %p148
      %p150 = scmp.ne.s32.totalorder %s142, %s145
      %p151 = scmp.eq.s32.totalorder %s16, 0
      %p152 = por %p150, %p151
      %p153 = scmp.ne.s32.totalorder %s142, %s145
      %p154 = scmp.eq.s32.totalorder %s21, 1
      %p155 = por %p153, %p154
      %p156 = scmp.ne.s32.totalorder %s145, %s146
      %p157 = scmp.eq.s32.totalorder %s21, 0
      %p158 = por %p156, %p157
      %p159 = scmp.ne.s32.totalorder %s145, %s146
      %p160 = scmp.eq.s32.totalorder %s22, 1
      %p161 = por %p159, %p160
      %p163 = scmp.ne.s32.totalorder %s146, %s162
      %p164 = scmp.eq.s32.totalorder %s22, 0
      %p165 = por %p163, %p164
      %p166 = scmp.le.s32.totalorder 1, %s16
      %p167 = scmp.lt.s32.totalorder %s16, 3
      %p168 = pnand %p166, %p167
      %p169 = pneg %p168
      // Predicated region
      $region9: #{tpu_custom_call.1} parent=5 // pred_check
        _
      $region10: #{tpu_custom_call.1} parent=5 // pred_check_branch
        %171 = sbr.rel (%p168) target = $region12
      $region11: #{tpu_custom_call.1} parent=5 // pred_region
        %s172 = ssub.s32 %s16, 1
        // Predicated region
        $region13: #{tpu_custom_call.1} parent=11 // pred_check
          %p173 = pneg %p109
        $region14: #{tpu_custom_call.1} parent=11 // pred_check_branch
          %175 = sbr.rel (%p173) target = $region16
        $region15: #{tpu_custom_call.1} parent=11 // pred_region
          _
        $region16: #{tpu_custom_call.1} parent=11 // pred_fallthru
          _
        // Predicated region
        $region17: #{tpu_custom_call.1} parent=11 // pred_check
          %p176 = pneg %p130
        $region18: #{tpu_custom_call.1} parent=11 // pred_check_branch
          %178 = sbr.rel (%p176) target = $region20
        $region19: #{tpu_custom_call.1} parent=11 // pred_region
          _
        $region20: #{tpu_custom_call.1} parent=11 // pred_fallthru
          _
      $region12: #{tpu_custom_call.1} parent=5 // pred_fallthru
        _
      %p179 = scmp.lt.s32.totalorder %s16, 2
      // Predicated region
      $region21: #{tpu_custom_call.1} parent=5 // pred_check
        %p180 = pneg %p179
      $region22: #{tpu_custom_call.1} parent=5 // pred_check_branch
        %182 = sbr.rel (%p180) target = $region24
      $region23: #{tpu_custom_call.1} parent=5 // pred_region
        // Predicated region
        $region25: #{tpu_custom_call.1} parent=23 // pred_check
          %p183 = pneg %p50
        $region26: #{tpu_custom_call.1} parent=23 // pred_check_branch
          %185 = sbr.rel (%p183) target = $region28
        $region27: #{tpu_custom_call.1} parent=23 // pred_region
          %s186 = smul.u32 4, %s24
          %s187 = ssub.s32 6, %s186
          %p188 = scmp.lt.s32.totalorder %s187, 4
          %s189 = scalar_select %p188, %s187, 4
          %s190 = smul.u32 128, %s189
          %p191 = scmp.lt.s32.totalorder %s23, 1
          %s192 = scalar_select %p191, %s23, 1
          %p193 = scmp.lt.s32.totalorder %s186, 5
          %s194 = scalar_select %p193, %s186, 5
          %s195 = smul.addr %s192, 6
          %s196 = sadd.s32 %s194, %s195
          %s197 = smul.addr %s196, 8
          %s198 = scalar_lea.vmem %s0, %s197
          %s199 = smul.u32 4, %s24
          %s200 = ssub.s32 6, %s199
          %p201 = scmp.lt.s32.totalorder %s200, 4
          %s202 = scalar_select %p201, %s200, 4
          %s203 = smul.u32 128, %s202
        $region28: #{tpu_custom_call.1} parent=23 // pred_fallthru
          _
        // Predicated region
        $region29: #{tpu_custom_call.1} parent=23 // pred_check
          %p204 = pneg %p82
        $region30: #{tpu_custom_call.1} parent=23 // pred_check_branch
          %206 = sbr.rel (%p204) target = $region32
        $region31: #{tpu_custom_call.1} parent=23 // pred_region
          %s207 = sand.u32 %s72, 1
          %s208 = scalar_lea.sflag [#allocation5], %s207
          %s209 = sand.u32 %s72, 1
          %s210 = smul.addr %s209, 16
          %s211 = scalar_lea.vmem [#allocation4], %s210
          %s212 = sadd.s32 %s24, 1
          %s213 = smul.u32 %s212, 2
          %s214 = smul.u32 2, %s213
          %s216 = ssub.s32 256, 256
          %217 = vsyncadd %s208, %s216
          %s218 = smul.addr %s23, 6
          %s219 = sadd.s32 %s214, %s218
          %s220 = smul.addr %s219, 128
          %s221 = scalar_lea.hbm %s1, %s220
          %s223 = sshll.u32 %s211, 4
          %s224 = int_to_ptr.vmem [resolvable:$true] %s223
          %226 = dma.hbm_to_vmem [thread:$0]  %s221, 256, %s224, %s208
        $region32: #{tpu_custom_call.1} parent=23 // pred_fallthru
          _
      $region24: #{tpu_custom_call.1} parent=5 // pred_fallthru
        _
      %p227 = scmp.le.s32.totalorder 1, %s16
      %p228 = scmp.lt.s32.totalorder %s16, 3
      %p229 = pnand %p227, %p228
      %p230 = pneg %p229
      // Predicated region
      $region33: #{tpu_custom_call.1} parent=5 // pred_check
        _
      $region34: #{tpu_custom_call.1} parent=5 // pred_check_branch
        %232 = sbr.rel (%p229) target = $region36
      $region35: #{tpu_custom_call.1} parent=5 // pred_region
        %s233 = ssub.s32 %s16, 1
        %s234 = sand.u32 %s75, 1
        %s235 = scalar_lea.sflag [#allocation5], %s234
        %s236 = sand.u32 %s75, 1
        %s237 = smul.addr %s236, 16
        %s238 = scalar_lea.vmem [#allocation4], %s237
        // Predicated region
        $region37: #{tpu_custom_call.1} parent=35 // pred_check
          %p239 = pneg %p88
        $region38: #{tpu_custom_call.1} parent=35 // pred_check_branch
          %241 = sbr.rel (%p239) target = $region40
        $region39: #{tpu_custom_call.1} parent=35 // pred_region
          %242 = dma.done %s235, 256
        $region40: #{tpu_custom_call.1} parent=35 // pred_fallthru
          _
        %s243 = smul.u32 4, %s26
        %s244 = ssub.s32 6, %s243
        %p245 = scmp.lt.s32.totalorder %s244, 4
        %s246 = scalar_select %p245, %s244, 4
        %s247 = smul.u32 128, %s246
        %p248 = scmp.lt.s32.totalorder %s25, 1
        %s249 = scalar_select %p248, %s25, 1
        %p250 = scmp.lt.s32.totalorder %s243, 5
        %s251 = scalar_select %p250, %s243, 5
        %s252 = smul.addr %s249, 6
        %s253 = sadd.s32 %s251, %s252
        %s254 = smul.addr %s253, 8
        %s255 = scalar_lea.vmem %s0, %s254
        %p256 = pneg %p56
        %p257 = pneg %p53
        %s258 = sand.u32 %s75, 1
        %s259 = scalar_lea.sflag [#allocation5], %s258
        %s260 = sand.u32 %s75, 1
        %s261 = smul.addr %s260, 16
        %s262 = scalar_lea.vmem [#allocation4], %s261
        %p263 = pneg %p88
        %p264 = pneg %p85
        %p265 = pneg %p109
        %p266 = pneg %p106
        %p267 = pneg %p130
        %p268 = pneg %p127
        %p269 = pneg %p158
        %p270 = pneg %p155
        %s271 = sand.u32 %s145, 1
        %s272 = scalar_lea.sflag [#allocation6], %s271
        %s273 = sand.u32 %s145, 1
        %s274 = smul.addr %s273, 32
        %s275 = scalar_lea.vmem [#allocation7], %s274
        %s276 = smul.u32 4, %s26
        %s277 = ssub.s32 6, %s276
        %p278 = scmp.lt.s32.totalorder %s277, 4
        %s279 = scalar_select %p278, %s277, 4
        %s280 = smul.u32 128, %s279
        %p281 = scmp.lt.s32.totalorder %s25, 1
        %s282 = scalar_select %p281, %s25, 1
        %p283 = scmp.lt.s32.totalorder %s276, 5
        %s284 = scalar_select %p283, %s276, 5
        %s285 = smul.addr %s282, 6
        %s286 = sadd.s32 %s284, %s285
        %s287 = smul.addr %s286, 8
        %s288 = scalar_lea.vmem %s0, %s287
        %s289 = smul.u32 4, %s26
        %s290 = ssub.s32 6, %s289
        %p291 = scmp.lt.s32.totalorder %s290, 4
        %s292 = scalar_select %p291, %s290, 4
        %s293 = smul.u32 128, %s292
        %s294 = sadd.s32 %s26, 1
        %s295 = smul.u32 %s294, 2
        %s296 = smul.u32 2, %s295
        %s297 = smul.u32 4, %s26
        %v298 = vld [vmem:[%s288] sm:$0xff]
        %v299 = vld [vmem:[%s288 + $0x8] sm:$0xff]
        %v300 = vld [vmem:[%s288 + $0x10] sm:$0xff]
        %v301 = vld [vmem:[%s288 + $0x18] sm:$0xff]
        %302 = vst [vmem:[#allocation2] sm:$0xff] %v298
        %303 = vst [vmem:[#allocation2 + $0x8] sm:$0xff] %v299
        %304 = vst [vmem:[#allocation2 + $0x10] sm:$0xff] %v300
        %305 = vst [vmem:[#allocation2 + $0x18] sm:$0xff] %v301
        %v306 = vld [vmem:[%s238] sm:$0xff]
        %v307 = vld [vmem:[%s238 + $0x8] sm:$0xff]
        %308 = vst [vmem:[#allocation2 + $0x20] sm:$0xff] %v306
        %309 = vst [vmem:[#allocation2 + $0x28] sm:$0xff] %v307
        %v310 = vld [vmem:[#allocation2] sm:$0xff]
        %v311 = vld [vmem:[#allocation2 + $0x8] sm:$0xff]
        %v312 = vld [vmem:[#allocation2 + $0x10] sm:$0xff]
        %v313 = vld [vmem:[#allocation2 + $0x18] sm:$0xff]
        %v314 = vld [vmem:[%s2] sm:$0xff]
        %vm315 = vcmask 64512
        %v317 = vsel %vm315, %v314, 0
        %319 = vmatprep.subr.mxu0 %v311
        %320 = vmatpush1.msra.mxu0 %v310
        %321 = vmatprep.subr.mxu0 0.0
        %322 = vmatpush1.msra.mxu0 0.0
        %323 = vmatprep.subr.mxu0 0.0
        %324 = vmatpush1.msra.mxu0 0.0
        %325 = vmatprep.subr.mxu0 0.0
        %326 = vmatpush1.msra.mxu0 0.0
        %327 = vmatprep.subr.mxu0 0.0
        %328 = vmatpush1.msra.mxu0 0.0
        %329 = vmatprep.subr.mxu0 0.0
        %330 = vmatpush1.msra.mxu0 0.0
        %331 = vmatprep.subr.mxu0 0.0
        %332 = vmatpush1.msra.mxu0 0.0
        %333 = vmatprep.subr.mxu0 0.0
        %334 = vmatpush1.msra.mxu0 0.0
        %335 = vmatprep.subr.mxu0 0.0
        %336 = vmatpush1.msra.mxu0 0.0
        %337 = vmatprep.subr.mxu0 0.0
        %338 = vmatpush1.msra.mxu0 0.0
        %339 = vmatprep.subr.mxu0 0.0
        %340 = vmatpush1.msra.mxu0 0.0
        %341 = vmatprep.subr.mxu0 0.0
        %342 = vmatpush1.msra.mxu0 0.0
        %343 = vmatprep.subr.mxu0 0.0
        %344 = vmatpush1.msra.mxu0 0.0
        %345 = vmatprep.subr.mxu0 0.0
        %346 = vmatpush1.msra.mxu0 0.0
        %347 = vmatprep.subr.mxu0 0.0
        %348 = vmatpush1.msra.mxu0 0.0
        %349 = vmatprep.subr.mxu0 0.0
        %350 = vmatpush1.msra.mxu0 0.0
        %351 = vmatprep.subr.mxu0 0.0
        %352 = vmatpush1.msra.mxu0 0.0
        %353 = vmatprep.subr.mxu0 0.0
        %354 = vmatpush1.msra.mxu0 0.0
        %355 = vmatprep.subr.mxu0 0.0
        %356 = vmatpush1.msra.mxu0 0.0
        %357 = vmatprep.subr.mxu0 0.0
        %358 = vmatpush1.msra.mxu0 0.0
        %359 = vmatprep.subr.mxu0 0.0
        %360 = vmatpush1.msra.mxu0 0.0
        %361 = vmatprep.subr.mxu0 0.0
        %362 = vmatpush1.msra.mxu0 0.0
        %363 = vmatprep.subr.mxu0 0.0
        %364 = vmatpush1.msra.mxu0 0.0
        %365 = vmatprep.subr.mxu0 0.0
        %366 = vmatpush1.msra.mxu0 0.0
        %367 = vmatprep.subr.mxu0 0.0
        %368 = vmatpush1.msra.mxu0 0.0
        %369 = vmatprep.subr.mxu0 0.0
        %370 = vmatpush1.msra.mxu0 0.0
        %371 = vmatprep.subr.mxu0 0.0
        %372 = vmatpush1.msra.mxu0 0.0
        %373 = vmatprep.subr.mxu0 0.0
        %374 = vmatpush1.msra.mxu0 0.0
        %375 = vmatprep.subr.mxu0 0.0
        %376 = vmatpush1.msra.mxu0 0.0
        %377 = vmatprep.subr.mxu0 0.0
        %378 = vmatpush1.msra.mxu0 0.0
        %379 = vmatprep.subr.mxu0 0.0
        %380 = vmatpush1.msra.mxu0 0.0
        %381 = vmatprep.subr.mxu0 0.0
        %382 = vmatpush1.msra.mxu0 0.0
        %383 = vmatprep.mubr.f32.mxu0 0.0
        %384 = vmatmul.mubr.f32.gmra.mrb[0].mxu0 %v317
        %v385 = vpop.f32.mrb[0].mxu0
        %v386 = vadd.f32 0.0, %v385
        %v387 = vpop.f32.mrb[0].mxu0
        %v388 = vadd.f32 0.0, %v387
        %389 = vdwg.mxu0
        %390 = vmatprep.subr.mxu0 %v313
        %391 = vmatpush1.msra.mxu0 %v312
        %392 = vmatprep.subr.mxu0 0.0
        %393 = vmatpush1.msra.mxu0 0.0
        %394 = vmatprep.subr.mxu0 0.0
        %395 = vmatpush1.msra.mxu0 0.0
        %396 = vmatprep.subr.mxu0 0.0
        %397 = vmatpush1.msra.mxu0 0.0
        %398 = vmatprep.subr.mxu0 0.0
        %399 = vmatpush1.msra.mxu0 0.0
        %400 = vmatprep.subr.mxu0 0.0
        %401 = vmatpush1.msra.mxu0 0.0
        %402 = vmatprep.subr.mxu0 0.0
        %403 = vmatpush1.msra.mxu0 0.0
        %404 = vmatprep.subr.mxu0 0.0
        %405 = vmatpush1.msra.mxu0 0.0
        %406 = vmatprep.subr.mxu0 0.0
        %407 = vmatpush1.msra.mxu0 0.0
        %408 = vmatprep.subr.mxu0 0.0
        %409 = vmatpush1.msra.mxu0 0.0
        %410 = vmatprep.subr.mxu0 0.0
        %411 = vmatpush1.msra.mxu0 0.0
        %412 = vmatprep.subr.mxu0 0.0
        %413 = vmatpush1.msra.mxu0 0.0
        %414 = vmatprep.subr.mxu0 0.0
        %415 = vmatpush1.msra.mxu0 0.0
        %416 = vmatprep.subr.mxu0 0.0
        %417 = vmatpush1.msra.mxu0 0.0
        %418 = vmatprep.subr.mxu0 0.0
        %419 = vmatpush1.msra.mxu0 0.0
        %420 = vmatprep.subr.mxu0 0.0
        %421 = vmatpush1.msra.mxu0 0.0
        %422 = vmatprep.subr.mxu0 0.0
        %423 = vmatpush1.msra.mxu0 0.0
        %424 = vmatprep.subr.mxu0 0.0
        %425 = vmatpush1.msra.mxu0 0.0
        %426 = vmatprep.subr.mxu0 0.0
        %427 = vmatpush1.msra.mxu0 0.0
        %428 = vmatprep.subr.mxu0 0.0
        %429 = vmatpush1.msra.mxu0 0.0
        %430 = vmatprep.subr.mxu0 0.0
        %431 = vmatpush1.msra.mxu0 0.0
        %432 = vmatprep.subr.mxu0 0.0
        %433 = vmatpush1.msra.mxu0 0.0
        %434 = vmatprep.subr.mxu0 0.0
        %435 = vmatpush1.msra.mxu0 0.0
        %436 = vmatprep.subr.mxu0 0.0
        %437 = vmatpush1.msra.mxu0 0.0
        %438 = vmatprep.subr.mxu0 0.0
        %439 = vmatpush1.msra.mxu0 0.0
        %440 = vmatprep.subr.mxu0 0.0
        %441 = vmatpush1.msra.mxu0 0.0
        %442 = vmatprep.subr.mxu0 0.0
        %443 = vmatpush1.msra.mxu0 0.0
        %444 = vmatprep.subr.mxu0 0.0
        %445 = vmatpush1.msra.mxu0 0.0
        %446 = vmatprep.subr.mxu0 0.0
        %447 = vmatpush1.msra.mxu0 0.0
        %448 = vmatprep.subr.mxu0 0.0
        %449 = vmatpush1.msra.mxu0 0.0
        %450 = vmatprep.subr.mxu0 0.0
        %451 = vmatpush1.msra.mxu0 0.0
        %452 = vmatprep.subr.mxu0 0.0
        %453 = vmatpush1.msra.mxu0 0.0
        %454 = vmatprep.mubr.f32.mxu0 0.0
        %455 = vmatmul.mubr.f32.gmra.mrb[0].mxu0 %v317
        %v456 = vpop.f32.mrb[0].mxu0
        %v457 = vadd.f32 0.0, %v456
        %v458 = vpop.f32.mrb[0].mxu0
        %v459 = vadd.f32 0.0, %v458
        %460 = vdwg.mxu0
        %461 = vst [vmem:[#allocation3] sm:$0xff] %v386
        %462 = vst [vmem:[#allocation3 + $0x8] sm:$0xff] %v388
        %463 = vst [vmem:[#allocation3 + $0x10] sm:$0xff] %v457
        %464 = vst [vmem:[#allocation3 + $0x18] sm:$0xff] %v459
        %v465 = vld [vmem:[#allocation2] sm:$0xff]
        %v466 = vld [vmem:[#allocation2 + $0x8] sm:$0xff]
        %v467 = vld [vmem:[#allocation2 + $0x10] sm:$0xff]
        %v468 = vld [vmem:[#allocation2 + $0x18] sm:$0xff]
        %v469 = vld [vmem:[#allocation2 + $0x20] sm:$0xff]
        %s470 = scalar_lea.vmem %s2, 8
        %v471 = vld [vmem:[%s470] sm:$0xff]
        %477 = vrot.lane.b32.xlu0 %v465, 127
        %v478 = vpop.permute.xlu0 %477
        %479 = vrot.lane.b32.xlu0 %v466, 127
        %v480 = vpop.permute.xlu0 %479
        %481 = vrot.lane.b32.xlu0 %v467, 127
        %v482 = vpop.permute.xlu0 %481
        %483 = vrot.lane.b32.xlu0 %v468, 127
        %v484 = vpop.permute.xlu0 %483
        %485 = vrot.lane.b32.xlu0 %v469, 127
        %v486 = vpop.permute.xlu0 %485
        %vm487 = vcmask 1039360
        %v488 = vsel %vm487, %v478, %v480
        %v489 = vsel %vm487, %v480, %v482
        %v490 = vsel %vm487, %v482, %v484
        %v491 = vsel %vm487, %v484, %v486
        %v497 = vsel %vm315, %v471, 0
        %499 = vmatprep.subr.mxu0 %v489
        %500 = vmatpush1.msra.mxu0 %v488
        %501 = vmatprep.subr.mxu0 0.0
        %502 = vmatpush1.msra.mxu0 0.0
        %503 = vmatprep.subr.mxu0 0.0
        %504 = vmatpush1.msra.mxu0 0.0
        %505 = vmatprep.subr.mxu0 0.0
        %506 = vmatpush1.msra.mxu0 0.0
        %507 = vmatprep.subr.mxu0 0.0
        %508 = vmatpush1.msra.mxu0 0.0
        %509 = vmatprep.subr.mxu0 0.0
        %510 = vmatpush1.msra.mxu0 0.0
        %511 = vmatprep.subr.mxu0 0.0
        %512 = vmatpush1.msra.mxu0 0.0
        %513 = vmatprep.subr.mxu0 0.0
        %514 = vmatpush1.msra.mxu0 0.0
        %515 = vmatprep.subr.mxu0 0.0
        %516 = vmatpush1.msra.mxu0 0.0
        %517 = vmatprep.subr.mxu0 0.0
        %518 = vmatpush1.msra.mxu0 0.0
        %519 = vmatprep.subr.mxu0 0.0
        %520 = vmatpush1.msra.mxu0 0.0
        %521 = vmatprep.subr.mxu0 0.0
        %522 = vmatpush1.msra.mxu0 0.0
        %523 = vmatprep.subr.mxu0 0.0
        %524 = vmatpush1.msra.mxu0 0.0
        %525 = vmatprep.subr.mxu0 0.0
        %526 = vmatpush1.msra.mxu0 0.0
        %527 = vmatprep.subr.mxu0 0.0
        %528 = vmatpush1.msra.mxu0 0.0
        %529 = vmatprep.subr.mxu0 0.0
        %530 = vmatpush1.msra.mxu0 0.0
        %531 = vmatprep.subr.mxu0 0.0
        %532 = vmatpush1.msra.mxu0 0.0
        %533 = vmatprep.subr.mxu0 0.0
        %534 = vmatpush1.msra.mxu0 0.0
        %535 = vmatprep.subr.mxu0 0.0
        %536 = vmatpush1.msra.mxu0 0.0
        %537 = vmatprep.subr.mxu0 0.0
        %538 = vmatpush1.msra.mxu0 0.0
        %539 = vmatprep.subr.mxu0 0.0
        %540 = vmatpush1.msra.mxu0 0.0
        %541 = vmatprep.subr.mxu0 0.0
        %542 = vmatpush1.msra.mxu0 0.0
        %543 = vmatprep.subr.mxu0 0.0
        %544 = vmatpush1.msra.mxu0 0.0
        %545 = vmatprep.subr.mxu0 0.0
        %546 = vmatpush1.msra.mxu0 0.0
        %547 = vmatprep.subr.mxu0 0.0
        %548 = vmatpush1.msra.mxu0 0.0
        %549 = vmatprep.subr.mxu0 0.0
        %550 = vmatpush1.msra.mxu0 0.0
        %551 = vmatprep.subr.mxu0 0.0
        %552 = vmatpush1.msra.mxu0 0.0
        %553 = vmatprep.subr.mxu0 0.0
        %554 = vmatpush1.msra.mxu0 0.0
        %555 = vmatprep.subr.mxu0 0.0
        %556 = vmatpush1.msra.mxu0 0.0
        %557 = vmatprep.subr.mxu0 0.0
        %558 = vmatpush1.msra.mxu0 0.0
        %559 = vmatprep.subr.mxu0 0.0
        %560 = vmatpush1.msra.mxu0 0.0
        %561 = vmatprep.subr.mxu0 0.0
        %562 = vmatpush1.msra.mxu0 0.0
        %563 = vmatprep.mubr.f32.mxu0 0.0
        %564 = vmatmul.mubr.f32.gmra.mrb[0].mxu0 %v497
        %v565 = vpop.f32.mrb[0].mxu0
        %v566 = vadd.f32 0.0, %v565
        %v567 = vpop.f32.mrb[0].mxu0
        %v568 = vadd.f32 0.0, %v567
        %569 = vdwg.mxu0
        %570 = vmatprep.subr.mxu0 %v491
        %571 = vmatpush1.msra.mxu0 %v490
        %572 = vmatprep.subr.mxu0 0.0
        %573 = vmatpush1.msra.mxu0 0.0
        %574 = vmatprep.subr.mxu0 0.0
        %575 = vmatpush1.msra.mxu0 0.0
        %576 = vmatprep.subr.mxu0 0.0
        %577 = vmatpush1.msra.mxu0 0.0
        %578 = vmatprep.subr.mxu0 0.0
        %579 = vmatpush1.msra.mxu0 0.0
        %580 = vmatprep.subr.mxu0 0.0
        %581 = vmatpush1.msra.mxu0 0.0
        %582 = vmatprep.subr.mxu0 0.0
        %583 = vmatpush1.msra.mxu0 0.0
        %584 = vmatprep.subr.mxu0 0.0
        %585 = vmatpush1.msra.mxu0 0.0
        %586 = vmatprep.subr.mxu0 0.0
        %587 = vmatpush1.msra.mxu0 0.0
        %588 = vmatprep.subr.mxu0 0.0
        %589 = vmatpush1.msra.mxu0 0.0
        %590 = vmatprep.subr.mxu0 0.0
        %591 = vmatpush1.msra.mxu0 0.0
        %592 = vmatprep.subr.mxu0 0.0
        %593 = vmatpush1.msra.mxu0 0.0
        %594 = vmatprep.subr.mxu0 0.0
        %595 = vmatpush1.msra.mxu0 0.0
        %596 = vmatprep.subr.mxu0 0.0
        %597 = vmatpush1.msra.mxu0 0.0
        %598 = vmatprep.subr.mxu0 0.0
        %599 = vmatpush1.msra.mxu0 0.0
        %600 = vmatprep.subr.mxu0 0.0
        %601 = vmatpush1.msra.mxu0 0.0
        %602 = vmatprep.subr.mxu0 0.0
        %603 = vmatpush1.msra.mxu0 0.0
        %604 = vmatprep.subr.mxu0 0.0
        %605 = vmatpush1.msra.mxu0 0.0
        %606 = vmatprep.subr.mxu0 0.0
        %607 = vmatpush1.msra.mxu0 0.0
        %608 = vmatprep.subr.mxu0 0.0
        %609 = vmatpush1.msra.mxu0 0.0
        %610 = vmatprep.subr.mxu0 0.0
        %611 = vmatpush1.msra.mxu0 0.0
        %612 = vmatprep.subr.mxu0 0.0
        %613 = vmatpush1.msra.mxu0 0.0
        %614 = vmatprep.subr.mxu0 0.0
        %615 = vmatpush1.msra.mxu0 0.0
        %616 = vmatprep.subr.mxu0 0.0
        %617 = vmatpush1.msra.mxu0 0.0
        %618 = vmatprep.subr.mxu0 0.0
        %619 = vmatpush1.msra.mxu0 0.0
        %620 = vmatprep.subr.mxu0 0.0
        %621 = vmatpush1.msra.mxu0 0.0
        %622 = vmatprep.subr.mxu0 0.0
        %623 = vmatpush1.msra.mxu0 0.0
        %624 = vmatprep.subr.mxu0 0.0
        %625 = vmatpush1.msra.mxu0 0.0
        %626 = vmatprep.subr.mxu0 0.0
        %627 = vmatpush1.msra.mxu0 0.0
        %628 = vmatprep.subr.mxu0 0.0
        %629 = vmatpush1.msra.mxu0 0.0
        %630 = vmatprep.subr.mxu0 0.0
        %631 = vmatpush1.msra.mxu0 0.0
        %632 = vmatprep.subr.mxu0 0.0
        %633 = vmatpush1.msra.mxu0 0.0
        %634 = vmatprep.mubr.f32.mxu0 0.0
        %635 = vmatmul.mubr.f32.gmra.mrb[0].mxu0 %v497
        %v636 = vpop.f32.mrb[0].mxu0
        %v637 = vadd.f32 0.0, %v636
        %v638 = vpop.f32.mrb[0].mxu0
        %v639 = vadd.f32 0.0, %v638
        %640 = vdwg.mxu0
        %v641 = vld [vmem:[#allocation3] sm:$0xff]
        %v642 = vld [vmem:[#allocation3 + $0x8] sm:$0xff]
        %v643 = vld [vmem:[#allocation3 + $0x10] sm:$0xff]
        %v644 = vld [vmem:[#allocation3 + $0x18] sm:$0xff]
        %v645 = vadd.f32 %v641, %v566
        %v646 = vadd.f32 %v642, %v568
        %v647 = vadd.f32 %v643, %v637
        %v648 = vadd.f32 %v644, %v639
        %649 = vst [vmem:[#allocation3] sm:$0xff] %v645
        %650 = vst [vmem:[#allocation3 + $0x8] sm:$0xff] %v646
        %651 = vst [vmem:[#allocation3 + $0x10] sm:$0xff] %v647
        %652 = vst [vmem:[#allocation3 + $0x18] sm:$0xff] %v648
        %v653 = vld [vmem:[#allocation2] sm:$0xff]
        %v654 = vld [vmem:[#allocation2 + $0x8] sm:$0xff]
        %v655 = vld [vmem:[#allocation2 + $0x10] sm:$0xff]
        %v656 = vld [vmem:[#allocation2 + $0x18] sm:$0xff]
        %v657 = vld [vmem:[#allocation2 + $0x20] sm:$0xff]
        %s658 = scalar_lea.vmem %s2, 16
        %v659 = vld [vmem:[%s658] sm:$0xff]
        %665 = vrot.lane.b32.xlu0 %v653, 126
        %v666 = vpop.permute.xlu0 %665
        %667 = vrot.lane.b32.xlu0 %v654, 126
        %v668 = vpop.permute.xlu0 %667
        %669 = vrot.lane.b32.xlu0 %v655, 126
        %v670 = vpop.permute.xlu0 %669
        %671 = vrot.lane.b32.xlu0 %v656, 126
        %v672 = vpop.permute.xlu0 %671
        %673 = vrot.lane.b32.xlu0 %v657, 126
        %v674 = vpop.permute.xlu0 %673
        %vm675 = vcmask 1031168
        %v676 = vsel %vm675, %v666, %v668
        %v677 = vsel %vm675, %v668, %v670
        %v678 = vsel %vm675, %v670, %v672
        %v679 = vsel %vm675, %v672, %v674
        %v685 = vsel %vm315, %v659, 0
        %687 = vmatprep.subr.mxu0 %v677
        %688 = vmatpush1.msra.mxu0 %v676
        %689 = vmatprep.subr.mxu0 0.0
        %690 = vmatpush1.msra.mxu0 0.0
        %691 = vmatprep.subr.mxu0 0.0
        %692 = vmatpush1.msra.mxu0 0.0
        %693 = vmatprep.subr.mxu0 0.0
        %694 = vmatpush1.msra.mxu0 0.0
        %695 = vmatprep.subr.mxu0 0.0
        %696 = vmatpush1.msra.mxu0 0.0
        %697 = vmatprep.subr.mxu0 0.0
        %698 = vmatpush1.msra.mxu0 0.0
        %699 = vmatprep.subr.mxu0 0.0
        %700 = vmatpush1.msra.mxu0 0.0
        %701 = vmatprep.subr.mxu0 0.0
        %702 = vmatpush1.msra.mxu0 0.0
        %703 = vmatprep.subr.mxu0 0.0
        %704 = vmatpush1.msra.mxu0 0.0
        %705 = vmatprep.subr.mxu0 0.0
        %706 = vmatpush1.msra.mxu0 0.0
        %707 = vmatprep.subr.mxu0 0.0
        %708 = vmatpush1.msra.mxu0 0.0
        %709 = vmatprep.subr.mxu0 0.0
        %710 = vmatpush1.msra.mxu0 0.0
        %711 = vmatprep.subr.mxu0 0.0
        %712 = vmatpush1.msra.mxu0 0.0
        %713 = vmatprep.subr.mxu0 0.0
        %714 = vmatpush1.msra.mxu0 0.0
        %715 = vmatprep.subr.mxu0 0.0
        %716 = vmatpush1.msra.mxu0 0.0
        %717 = vmatprep.subr.mxu0 0.0
        %718 = vmatpush1.msra.mxu0 0.0
        %719 = vmatprep.subr.mxu0 0.0
        %720 = vmatpush1.msra.mxu0 0.0
        %721 = vmatprep.subr.mxu0 0.0
        %722 = vmatpush1.msra.mxu0 0.0
        %723 = vmatprep.subr.mxu0 0.0
        %724 = vmatpush1.msra.mxu0 0.0
        %725 = vmatprep.subr.mxu0 0.0
        %726 = vmatpush1.msra.mxu0 0.0
        %727 = vmatprep.subr.mxu0 0.0
        %728 = vmatpush1.msra.mxu0 0.0
        %729 = vmatprep.subr.mxu0 0.0
        %730 = vmatpush1.msra.mxu0 0.0
        %731 = vmatprep.subr.mxu0 0.0
        %732 = vmatpush1.msra.mxu0 0.0
        %733 = vmatprep.subr.mxu0 0.0
        %734 = vmatpush1.msra.mxu0 0.0
        %735 = vmatprep.subr.mxu0 0.0
        %736 = vmatpush1.msra.mxu0 0.0
        %737 = vmatprep.subr.mxu0 0.0
        %738 = vmatpush1.msra.mxu0 0.0
        %739 = vmatprep.subr.mxu0 0.0
        %740 = vmatpush1.msra.mxu0 0.0
        %741 = vmatprep.subr.mxu0 0.0
        %742 = vmatpush1.msra.mxu0 0.0
        %743 = vmatprep.subr.mxu0 0.0
        %744 = vmatpush1.msra.mxu0 0.0
        %745 = vmatprep.subr.mxu0 0.0
        %746 = vmatpush1.msra.mxu0 0.0
        %747 = vmatprep.subr.mxu0 0.0
        %748 = vmatpush1.msra.mxu0 0.0
        %749 = vmatprep.subr.mxu0 0.0
        %750 = vmatpush1.msra.mxu0 0.0
        %751 = vmatprep.mubr.f32.mxu0 0.0
        %752 = vmatmul.mubr.f32.gmra.mrb[0].mxu0 %v685
        %v753 = vpop.f32.mrb[0].mxu0
        %v754 = vadd.f32 0.0, %v753
        %v755 = vpop.f32.mrb[0].mxu0
        %v756 = vadd.f32 0.0, %v755
        %757 = vdwg.mxu0
        %758 = vmatprep.subr.mxu0 %v679
        %759 = vmatpush1.msra.mxu0 %v678
        %760 = vmatprep.subr.mxu0 0.0
        %761 = vmatpush1.msra.mxu0 0.0
        %762 = vmatprep.subr.mxu0 0.0
        %763 = vmatpush1.msra.mxu0 0.0
        %764 = vmatprep.subr.mxu0 0.0
        %765 = vmatpush1.msra.mxu0 0.0
        %766 = vmatprep.subr.mxu0 0.0
        %767 = vmatpush1.msra.mxu0 0.0
        %768 = vmatprep.subr.mxu0 0.0
        %769 = vmatpush1.msra.mxu0 0.0
        %770 = vmatprep.subr.mxu0 0.0
        %771 = vmatpush1.msra.mxu0 0.0
        %772 = vmatprep.subr.mxu0 0.0
        %773 = vmatpush1.msra.mxu0 0.0
        %774 = vmatprep.subr.mxu0 0.0
        %775 = vmatpush1.msra.mxu0 0.0
        %776 = vmatprep.subr.mxu0 0.0
        %777 = vmatpush1.msra.mxu0 0.0
        %778 = vmatprep.subr.mxu0 0.0
        %779 = vmatpush1.msra.mxu0 0.0
        %780 = vmatprep.subr.mxu0 0.0
        %781 = vmatpush1.msra.mxu0 0.0
        %782 = vmatprep.subr.mxu0 0.0
        %783 = vmatpush1.msra.mxu0 0.0
        %784 = vmatprep.subr.mxu0 0.0
        %785 = vmatpush1.msra.mxu0 0.0
        %786 = vmatprep.subr.mxu0 0.0
        %787 = vmatpush1.msra.mxu0 0.0
        %788 = vmatprep.subr.mxu0 0.0
        %789 = vmatpush1.msra.mxu0 0.0
        %790 = vmatprep.subr.mxu0 0.0
        %791 = vmatpush1.msra.mxu0 0.0
        %792 = vmatprep.subr.mxu0 0.0
        %793 = vmatpush1.msra.mxu0 0.0
        %794 = vmatprep.subr.mxu0 0.0
        %795 = vmatpush1.msra.mxu0 0.0
        %796 = vmatprep.subr.mxu0 0.0
        %797 = vmatpush1.msra.mxu0 0.0
        %798 = vmatprep.subr.mxu0 0.0
        %799 = vmatpush1.msra.mxu0 0.0
        %800 = vmatprep.subr.mxu0 0.0
        %801 = vmatpush1.msra.mxu0 0.0
        %802 = vmatprep.subr.mxu0 0.0
        %803 = vmatpush1.msra.mxu0 0.0
        %804 = vmatprep.subr.mxu0 0.0
        %805 = vmatpush1.msra.mxu0 0.0
        %806 = vmatprep.subr.mxu0 0.0
        %807 = vmatpush1.msra.mxu0 0.0
        %808 = vmatprep.subr.mxu0 0.0
        %809 = vmatpush1.msra.mxu0 0.0
        %810 = vmatprep.subr.mxu0 0.0
        %811 = vmatpush1.msra.mxu0 0.0
        %812 = vmatprep.subr.mxu0 0.0
        %813 = vmatpush1.msra.mxu0 0.0
        %814 = vmatprep.subr.mxu0 0.0
        %815 = vmatpush1.msra.mxu0 0.0
        %816 = vmatprep.subr.mxu0 0.0
        %817 = vmatpush1.msra.mxu0 0.0
        %818 = vmatprep.subr.mxu0 0.0
        %819 = vmatpush1.msra.mxu0 0.0
        %820 = vmatprep.subr.mxu0 0.0
        %821 = vmatpush1.msra.mxu0 0.0
        %822 = vmatprep.mubr.f32.mxu0 0.0
        %823 = vmatmul.mubr.f32.gmra.mrb[0].mxu0 %v685
        %v824 = vpop.f32.mrb[0].mxu0
        %v825 = vadd.f32 0.0, %v824
        %v826 = vpop.f32.mrb[0].mxu0
        %v827 = vadd.f32 0.0, %v826
        %828 = vdwg.mxu0
        %v829 = vld [vmem:[#allocation3] sm:$0xff]
        %v830 = vld [vmem:[#allocation3 + $0x8] sm:$0xff]
        %v831 = vld [vmem:[#allocation3 + $0x10] sm:$0xff]
        %v832 = vld [vmem:[#allocation3 + $0x18] sm:$0xff]
        %v833 = vadd.f32 %v829, %v754
        %v834 = vadd.f32 %v830, %v756
        %v835 = vadd.f32 %v831, %v825
        %v836 = vadd.f32 %v832, %v827
        %837 = vst [vmem:[#allocation3] sm:$0xff] %v833
        %838 = vst [vmem:[#allocation3 + $0x8] sm:$0xff] %v834
        %839 = vst [vmem:[#allocation3 + $0x10] sm:$0xff] %v835
        %840 = vst [vmem:[#allocation3 + $0x18] sm:$0xff] %v836
        %v841 = vld [vmem:[#allocation2] sm:$0xff]
        %v842 = vld [vmem:[#allocation2 + $0x8] sm:$0xff]
        %v843 = vld [vmem:[#allocation2 + $0x10] sm:$0xff]
        %v844 = vld [vmem:[#allocation2 + $0x18] sm:$0xff]
        %v845 = vld [vmem:[#allocation2 + $0x20] sm:$0xff]
        %s846 = scalar_lea.vmem %s2, 24
        %v847 = vld [vmem:[%s846] sm:$0xff]
        %853 = vrot.lane.b32.xlu0 %v841, 96
        %v854 = vpop.permute.xlu0 %853
        %855 = vrot.lane.b32.xlu0 %v842, 96
        %v856 = vpop.permute.xlu0 %855
        %857 = vrot.lane.b32.xlu0 %v843, 96
        %v858 = vpop.permute.xlu0 %857
        %859 = vrot.lane.b32.xlu0 %v844, 96
        %v860 = vpop.permute.xlu0 %859
        %861 = vrot.lane.b32.xlu0 %v845, 96
        %v862 = vpop.permute.xlu0 %861
        %vm863 = vcmask 785408
        %v864 = vsel %vm863, %v854, %v856
        %v865 = vsel %vm863, %v856, %v858
        %v866 = vsel %vm863, %v858, %v860
        %v867 = vsel %vm863, %v860, %v862
        %v873 = vsel %vm315, %v847, 0
        %875 = vmatprep.subr.mxu0 %v865
        %876 = vmatpush1.msra.mxu0 %v864
        %877 = vmatprep.subr.mxu0 0.0
        %878 = vmatpush1.msra.mxu0 0.0
        %879 = vmatprep.subr.mxu0 0.0
        %880 = vmatpush1.msra.mxu0 0.0
        %881 = vmatprep.subr.mxu0 0.0
        %882 = vmatpush1.msra.mxu0 0.0
        %883 = vmatprep.subr.mxu0 0.0
        %884 = vmatpush1.msra.mxu0 0.0
        %885 = vmatprep.subr.mxu0 0.0
        %886 = vmatpush1.msra.mxu0 0.0
        %887 = vmatprep.subr.mxu0 0.0
        %888 = vmatpush1.msra.mxu0 0.0
        %889 = vmatprep.subr.mxu0 0.0
        %890 = vmatpush1.msra.mxu0 0.0
        %891 = vmatprep.subr.mxu0 0.0
        %892 = vmatpush1.msra.mxu0 0.0
        %893 = vmatprep.subr.mxu0 0.0
        %894 = vmatpush1.msra.mxu0 0.0
        %895 = vmatprep.subr.mxu0 0.0
        %896 = vmatpush1.msra.mxu0 0.0
        %897 = vmatprep.subr.mxu0 0.0
        %898 = vmatpush1.msra.mxu0 0.0
        %899 = vmatprep.subr.mxu0 0.0
        %900 = vmatpush1.msra.mxu0 0.0
        %901 = vmatprep.subr.mxu0 0.0
        %902 = vmatpush1.msra.mxu0 0.0
        %903 = vmatprep.subr.mxu0 0.0
        %904 = vmatpush1.msra.mxu0 0.0
        %905 = vmatprep.subr.mxu0 0.0
        %906 = vmatpush1.msra.mxu0 0.0
        %907 = vmatprep.subr.mxu0 0.0
        %908 = vmatpush1.msra.mxu0 0.0
        %909 = vmatprep.subr.mxu0 0.0
        %910 = vmatpush1.msra.mxu0 0.0
        %911 = vmatprep.subr.mxu0 0.0
        %912 = vmatpush1.msra.mxu0 0.0
        %913 = vmatprep.subr.mxu0 0.0
        %914 = vmatpush1.msra.mxu0 0.0
        %915 = vmatprep.subr.mxu0 0.0
        %916 = vmatpush1.msra.mxu0 0.0
        %917 = vmatprep.subr.mxu0 0.0
        %918 = vmatpush1.msra.mxu0 0.0
        %919 = vmatprep.subr.mxu0 0.0
        %920 = vmatpush1.msra.mxu0 0.0
        %921 = vmatprep.subr.mxu0 0.0
        %922 = vmatpush1.msra.mxu0 0.0
        %923 = vmatprep.subr.mxu0 0.0
        %924 = vmatpush1.msra.mxu0 0.0
        %925 = vmatprep.subr.mxu0 0.0
        %926 = vmatpush1.msra.mxu0 0.0
        %927 = vmatprep.subr.mxu0 0.0
        %928 = vmatpush1.msra.mxu0 0.0
        %929 = vmatprep.subr.mxu0 0.0
        %930 = vmatpush1.msra.mxu0 0.0
        %931 = vmatprep.subr.mxu0 0.0
        %932 = vmatpush1.msra.mxu0 0.0
        %933 = vmatprep.subr.mxu0 0.0
        %934 = vmatpush1.msra.mxu0 0.0
        %935 = vmatprep.subr.mxu0 0.0
        %936 = vmatpush1.msra.mxu0 0.0
        %937 = vmatprep.subr.mxu0 0.0
        %938 = vmatpush1.msra.mxu0 0.0
        %939 = vmatprep.mubr.f32.mxu0 0.0
        %940 = vmatmul.mubr.f32.gmra.mrb[0].mxu0 %v873
        %v941 = vpop.f32.mrb[0].mxu0
        %v942 = vadd.f32 0.0, %v941
        %v943 = vpop.f32.mrb[0].mxu0
        %v944 = vadd.f32 0.0, %v943
        %945 = vdwg.mxu0
        %946 = vmatprep.subr.mxu0 %v867
        %947 = vmatpush1.msra.mxu0 %v866
        %948 = vmatprep.subr.mxu0 0.0
        %949 = vmatpush1.msra.mxu0 0.0
        %950 = vmatprep.subr.mxu0 0.0
        %951 = vmatpush1.msra.mxu0 0.0
        %952 = vmatprep.subr.mxu0 0.0
        %953 = vmatpush1.msra.mxu0 0.0
        %954 = vmatprep.subr.mxu0 0.0
        %955 = vmatpush1.msra.mxu0 0.0
        %956 = vmatprep.subr.mxu0 0.0
        %957 = vmatpush1.msra.mxu0 0.0
        %958 = vmatprep.subr.mxu0 0.0
        %959 = vmatpush1.msra.mxu0 0.0
        %960 = vmatprep.subr.mxu0 0.0
        %961 = vmatpush1.msra.mxu0 0.0
        %962 = vmatprep.subr.mxu0 0.0
        %963 = vmatpush1.msra.mxu0 0.0
        %964 = vmatprep.subr.mxu0 0.0
        %965 = vmatpush1.msra.mxu0 0.0
        %966 = vmatprep.subr.mxu0 0.0
        %967 = vmatpush1.msra.mxu0 0.0
        %968 = vmatprep.subr.mxu0 0.0
        %969 = vmatpush1.msra.mxu0 0.0
        %970 = vmatprep.subr.mxu0 0.0
        %971 = vmatpush1.msra.mxu0 0.0
        %972 = vmatprep.subr.mxu0 0.0
        %973 = vmatpush1.msra.mxu0 0.0
        %974 = vmatprep.subr.mxu0 0.0
        %975 = vmatpush1.msra.mxu0 0.0
        %976 = vmatprep.subr.mxu0 0.0
        %977 = vmatpush1.msra.mxu0 0.0
        %978 = vmatprep.subr.mxu0 0.0
        %979 = vmatpush1.msra.mxu0 0.0
        %980 = vmatprep.subr.mxu0 0.0
        %981 = vmatpush1.msra.mxu0 0.0
        %982 = vmatprep.subr.mxu0 0.0
        %983 = vmatpush1.msra.mxu0 0.0
        %984 = vmatprep.subr.mxu0 0.0
        %985 = vmatpush1.msra.mxu0 0.0
        %986 = vmatprep.subr.mxu0 0.0
        %987 = vmatpush1.msra.mxu0 0.0
        %988 = vmatprep.subr.mxu0 0.0
        %989 = vmatpush1.msra.mxu0 0.0
        %990 = vmatprep.subr.mxu0 0.0
        %991 = vmatpush1.msra.mxu0 0.0
        %992 = vmatprep.subr.mxu0 0.0
        %993 = vmatpush1.msra.mxu0 0.0
        %994 = vmatprep.subr.mxu0 0.0
        %995 = vmatpush1.msra.mxu0 0.0
        %996 = vmatprep.subr.mxu0 0.0
        %997 = vmatpush1.msra.mxu0 0.0
        %998 = vmatprep.subr.mxu0 0.0
        %999 = vmatpush1.msra.mxu0 0.0
        %1000 = vmatprep.subr.mxu0 0.0
        %1001 = vmatpush1.msra.mxu0 0.0
        %1002 = vmatprep.subr.mxu0 0.0
        %1003 = vmatpush1.msra.mxu0 0.0
        %1004 = vmatprep.subr.mxu0 0.0
        %1005 = vmatpush1.msra.mxu0 0.0
        %1006 = vmatprep.subr.mxu0 0.0
        %1007 = vmatpush1.msra.mxu0 0.0
        %1008 = vmatprep.subr.mxu0 0.0
        %1009 = vmatpush1.msra.mxu0 0.0
        %1010 = vmatprep.mubr.f32.mxu0 0.0
        %1011 = vmatmul.mubr.f32.gmra.mrb[0].mxu0 %v873
        %v1012 = vpop.f32.mrb[0].mxu0
        %v1013 = vadd.f32 0.0, %v1012
        %v1014 = vpop.f32.mrb[0].mxu0
        %v1015 = vadd.f32 0.0, %v1014
        %1016 = vdwg.mxu0
        %v1017 = vld [vmem:[#allocation3] sm:$0xff]
        %v1018 = vld [vmem:[#allocation3 + $0x8] sm:$0xff]
        %v1019 = vld [vmem:[#allocation3 + $0x10] sm:$0xff]
        %v1020 = vld [vmem:[#allocation3 + $0x18] sm:$0xff]
        %v1021 = vadd.f32 %v1017, %v942
        %v1022 = vadd.f32 %v1018, %v944
        %v1023 = vadd.f32 %v1019, %v1013
        %v1024 = vadd.f32 %v1020, %v1015
        %1025 = vst [vmem:[#allocation3] sm:$0xff] %v1021
        %1026 = vst [vmem:[#allocation3 + $0x8] sm:$0xff] %v1022
        %1027 = vst [vmem:[#allocation3 + $0x10] sm:$0xff] %v1023
        %1028 = vst [vmem:[#allocation3 + $0x18] sm:$0xff] %v1024
        %v1029 = vld [vmem:[#allocation2] sm:$0xff]
        %v1030 = vld [vmem:[#allocation2 + $0x8] sm:$0xff]
        %v1031 = vld [vmem:[#allocation2 + $0x10] sm:$0xff]
        %v1032 = vld [vmem:[#allocation2 + $0x18] sm:$0xff]
        %v1033 = vld [vmem:[#allocation2 + $0x20] sm:$0xff]
        %s1034 = scalar_lea.vmem %s2, 32
        %v1035 = vld [vmem:[%s1034] sm:$0xff]
        %1041 = vrot.lane.b32.xlu0 %v1029, 95
        %v1042 = vpop.permute.xlu0 %1041
        %1043 = vrot.lane.b32.xlu0 %v1030, 95
        %v1044 = vpop.permute.xlu0 %1043
        %1045 = vrot.lane.b32.xlu0 %v1031, 95
        %v1046 = vpop.permute.xlu0 %1045
        %1047 = vrot.lane.b32.xlu0 %v1032, 95
        %v1048 = vpop.permute.xlu0 %1047
        %1049 = vrot.lane.b32.xlu0 %v1033, 95
        %v1050 = vpop.permute.xlu0 %1049
        %vm1051 = vcmask 777216
        %v1052 = vsel %vm1051, %v1042, %v1044
        %v1053 = vsel %vm1051, %v1044, %v1046
        %v1054 = vsel %vm1051, %v1046, %v1048
        %v1055 = vsel %vm1051, %v1048, %v1050
        %v1061 = vsel %vm315, %v1035, 0
        %1063 = vmatprep.subr.mxu0 %v1053
        %1064 = vmatpush1.msra.mxu0 %v1052
        %1065 = vmatprep.subr.mxu0 0.0
        %1066 = vmatpush1.msra.mxu0 0.0
        %1067 = vmatprep.subr.mxu0 0.0
        %1068 = vmatpush1.msra.mxu0 0.0
        %1069 = vmatprep.subr.mxu0 0.0
        %1070 = vmatpush1.msra.mxu0 0.0
        %1071 = vmatprep.subr.mxu0 0.0
        %1072 = vmatpush1.msra.mxu0 0.0
        %1073 = vmatprep.subr.mxu0 0.0
        %1074 = vmatpush1.msra.mxu0 0.0
        %1075 = vmatprep.subr.mxu0 0.0
        %1076 = vmatpush1.msra.mxu0 0.0
        %1077 = vmatprep.subr.mxu0 0.0
        %1078 = vmatpush1.msra.mxu0 0.0
        %1079 = vmatprep.subr.mxu0 0.0
        %1080 = vmatpush1.msra.mxu0 0.0
        %1081 = vmatprep.subr.mxu0 0.0
        %1082 = vmatpush1.msra.mxu0 0.0
        %1083 = vmatprep.subr.mxu0 0.0
        %1084 = vmatpush1.msra.mxu0 0.0
        %1085 = vmatprep.subr.mxu0 0.0
        %1086 = vmatpush1.msra.mxu0 0.0
        %1087 = vmatprep.subr.mxu0 0.0
        %1088 = vmatpush1.msra.mxu0 0.0
        %1089 = vmatprep.subr.mxu0 0.0
        %1090 = vmatpush1.msra.mxu0 0.0
        %1091 = vmatprep.subr.mxu0 0.0
        %1092 = vmatpush1.msra.mxu0 0.0
        %1093 = vmatprep.subr.mxu0 0.0
        %1094 = vmatpush1.msra.mxu0 0.0
        %1095 = vmatprep.subr.mxu0 0.0
        %1096 = vmatpush1.msra.mxu0 0.0
        %1097 = vmatprep.subr.mxu0 0.0
        %1098 = vmatpush1.msra.mxu0 0.0
        %1099 = vmatprep.subr.mxu0 0.0
        %1100 = vmatpush1.msra.mxu0 0.0
        %1101 = vmatprep.subr.mxu0 0.0
        %1102 = vmatpush1.msra.mxu0 0.0
        %1103 = vmatprep.subr.mxu0 0.0
        %1104 = vmatpush1.msra.mxu0 0.0
        %1105 = vmatprep.subr.mxu0 0.0
        %1106 = vmatpush1.msra.mxu0 0.0
        %1107 = vmatprep.subr.mxu0 0.0
        %1108 = vmatpush1.msra.mxu0 0.0
        %1109 = vmatprep.subr.mxu0 0.0
        %1110 = vmatpush1.msra.mxu0 0.0
        %1111 = vmatprep.subr.mxu0 0.0
        %1112 = vmatpush1.msra.mxu0 0.0
        %1113 = vmatprep.subr.mxu0 0.0
        %1114 = vmatpush1.msra.mxu0 0.0
        %1115 = vmatprep.subr.mxu0 0.0
        %1116 = vmatpush1.msra.mxu0 0.0
        %1117 = vmatprep.subr.mxu0 0.0
        %1118 = vmatpush1.msra.mxu0 0.0
        %1119 = vmatprep.subr.mxu0 0.0
        %1120 = vmatpush1.msra.mxu0 0.0
        %1121 = vmatprep.subr.mxu0 0.0
        %1122 = vmatpush1.msra.mxu0 0.0
        %1123 = vmatprep.subr.mxu0 0.0
        %1124 = vmatpush1.msra.mxu0 0.0
        %1125 = vmatprep.subr.mxu0 0.0
        %1126 = vmatpush1.msra.mxu0 0.0
        %1127 = vmatprep.mubr.f32.mxu0 0.0
        %1128 = vmatmul.mubr.f32.gmra.mrb[0].mxu0 %v1061
        %v1129 = vpop.f32.mrb[0].mxu0
        %v1130 = vadd.f32 0.0, %v1129
        %v1131 = vpop.f32.mrb[0].mxu0
        %v1132 = vadd.f32 0.0, %v1131
        %1133 = vdwg.mxu0
        %1134 = vmatprep.subr.mxu0 %v1055
        %1135 = vmatpush1.msra.mxu0 %v1054
        %1136 = vmatprep.subr.mxu0 0.0
        %1137 = vmatpush1.msra.mxu0 0.0
        %1138 = vmatprep.subr.mxu0 0.0
        %1139 = vmatpush1.msra.mxu0 0.0
        %1140 = vmatprep.subr.mxu0 0.0
        %1141 = vmatpush1.msra.mxu0 0.0
        %1142 = vmatprep.subr.mxu0 0.0
        %1143 = vmatpush1.msra.mxu0 0.0
        %1144 = vmatprep.subr.mxu0 0.0
        %1145 = vmatpush1.msra.mxu0 0.0
        %1146 = vmatprep.subr.mxu0 0.0
        %1147 = vmatpush1.msra.mxu0 0.0
        %1148 = vmatprep.subr.mxu0 0.0
        %1149 = vmatpush1.msra.mxu0 0.0
        %1150 = vmatprep.subr.mxu0 0.0
        %1151 = vmatpush1.msra.mxu0 0.0
        %1152 = vmatprep.subr.mxu0 0.0
        %1153 = vmatpush1.msra.mxu0 0.0
        %1154 = vmatprep.subr.mxu0 0.0
        %1155 = vmatpush1.msra.mxu0 0.0
        %1156 = vmatprep.subr.mxu0 0.0
        %1157 = vmatpush1.msra.mxu0 0.0
        %1158 = vmatprep.subr.mxu0 0.0
        %1159 = vmatpush1.msra.mxu0 0.0
        %1160 = vmatprep.subr.mxu0 0.0
        %1161 = vmatpush1.msra.mxu0 0.0
        %1162 = vmatprep.subr.mxu0 0.0
        %1163 = vmatpush1.msra.mxu0 0.0
        %1164 = vmatprep.subr.mxu0 0.0
        %1165 = vmatpush1.msra.mxu0 0.0
        %1166 = vmatprep.subr.mxu0 0.0
        %1167 = vmatpush1.msra.mxu0 0.0
        %1168 = vmatprep.subr.mxu0 0.0
        %1169 = vmatpush1.msra.mxu0 0.0
        %1170 = vmatprep.subr.mxu0 0.0
        %1171 = vmatpush1.msra.mxu0 0.0
        %1172 = vmatprep.subr.mxu0 0.0
        %1173 = vmatpush1.msra.mxu0 0.0
        %1174 = vmatprep.subr.mxu0 0.0
        %1175 = vmatpush1.msra.mxu0 0.0
        %1176 = vmatprep.subr.mxu0 0.0
        %1177 = vmatpush1.msra.mxu0 0.0
        %1178 = vmatprep.subr.mxu0 0.0
        %1179 = vmatpush1.msra.mxu0 0.0
        %1180 = vmatprep.subr.mxu0 0.0
        %1181 = vmatpush1.msra.mxu0 0.0
        %1182 = vmatprep.subr.mxu0 0.0
        %1183 = vmatpush1.msra.mxu0 0.0
        %1184 = vmatprep.subr.mxu0 0.0
        %1185 = vmatpush1.msra.mxu0 0.0
        %1186 = vmatprep.subr.mxu0 0.0
        %1187 = vmatpush1.msra.mxu0 0.0
        %1188 = vmatprep.subr.mxu0 0.0
        %1189 = vmatpush1.msra.mxu0 0.0
        %1190 = vmatprep.subr.mxu0 0.0
        %1191 = vmatpush1.msra.mxu0 0.0
        %1192 = vmatprep.subr.mxu0 0.0
        %1193 = vmatpush1.msra.mxu0 0.0
        %1194 = vmatprep.subr.mxu0 0.0
        %1195 = vmatpush1.msra.mxu0 0.0
        %1196 = vmatprep.subr.mxu0 0.0
        %1197 = vmatpush1.msra.mxu0 0.0
        %1198 = vmatprep.mubr.f32.mxu0 0.0
        %1199 = vmatmul.mubr.f32.gmra.mrb[0].mxu0 %v1061
        %v1200 = vpop.f32.mrb[0].mxu0
        %v1201 = vadd.f32 0.0, %v1200
        %v1202 = vpop.f32.mrb[0].mxu0
        %v1203 = vadd.f32 0.0, %v1202
        %1204 = vdwg.mxu0
        %v1205 = vld [vmem:[#allocation3] sm:$0xff]
        %v1206 = vld [vmem:[#allocation3 + $0x8] sm:$0xff]
        %v1207 = vld [vmem:[#allocation3 + $0x10] sm:$0xff]
        %v1208 = vld [vmem:[#allocation3 + $0x18] sm:$0xff]
        %v1209 = vadd.f32 %v1205, %v1130
        %v1210 = vadd.f32 %v1206, %v1132
        %v1211 = vadd.f32 %v1207, %v1201
        %v1212 = vadd.f32 %v1208, %v1203
        %1213 = vst [vmem:[#allocation3] sm:$0xff] %v1209
        %1214 = vst [vmem:[#allocation3 + $0x8] sm:$0xff] %v1210
        %1215 = vst [vmem:[#allocation3 + $0x10] sm:$0xff] %v1211
        %1216 = vst [vmem:[#allocation3 + $0x18] sm:$0xff] %v1212
        %v1217 = vld [vmem:[#allocation2] sm:$0xff]
        %v1218 = vld [vmem:[#allocation2 + $0x8] sm:$0xff]
        %v1219 = vld [vmem:[#allocation2 + $0x10] sm:$0xff]
        %v1220 = vld [vmem:[#allocation2 + $0x18] sm:$0xff]
        %v1221 = vld [vmem:[#allocation2 + $0x20] sm:$0xff]
        %s1222 = scalar_lea.vmem %s2, 40
        %v1223 = vld [vmem:[%s1222] sm:$0xff]
        %1229 = vrot.lane.b32.xlu0 %v1217, 94
        %v1230 = vpop.permute.xlu0 %1229
        %1231 = vrot.lane.b32.xlu0 %v1218, 94
        %v1232 = vpop.permute.xlu0 %1231
        %1233 = vrot.lane.b32.xlu0 %v1219, 94
        %v1234 = vpop.permute.xlu0 %1233
        %1235 = vrot.lane.b32.xlu0 %v1220, 94
        %v1236 = vpop.permute.xlu0 %1235
        %1237 = vrot.lane.b32.xlu0 %v1221, 94
        %v1238 = vpop.permute.xlu0 %1237
        %vm1239 = vcmask 769024
        %v1240 = vsel %vm1239, %v1230, %v1232
        %v1241 = vsel %vm1239, %v1232, %v1234
        %v1242 = vsel %vm1239, %v1234, %v1236
        %v1243 = vsel %vm1239, %v1236, %v1238
        %v1249 = vsel %vm315, %v1223, 0
        %1251 = vmatprep.subr.mxu0 %v1241
        %1252 = vmatpush1.msra.mxu0 %v1240
        %1253 = vmatprep.subr.mxu0 0.0
        %1254 = vmatpush1.msra.mxu0 0.0
        %1255 = vmatprep.subr.mxu0 0.0
        %1256 = vmatpush1.msra.mxu0 0.0
        %1257 = vmatprep.subr.mxu0 0.0
        %1258 = vmatpush1.msra.mxu0 0.0
        %1259 = vmatprep.subr.mxu0 0.0
        %1260 = vmatpush1.msra.mxu0 0.0
        %1261 = vmatprep.subr.mxu0 0.0
        %1262 = vmatpush1.msra.mxu0 0.0
        %1263 = vmatprep.subr.mxu0 0.0
        %1264 = vmatpush1.msra.mxu0 0.0
        %1265 = vmatprep.subr.mxu0 0.0
        %1266 = vmatpush1.msra.mxu0 0.0
        %1267 = vmatprep.subr.mxu0 0.0
        %1268 = vmatpush1.msra.mxu0 0.0
        %1269 = vmatprep.subr.mxu0 0.0
        %1270 = vmatpush1.msra.mxu0 0.0
        %1271 = vmatprep.subr.mxu0 0.0
        %1272 = vmatpush1.msra.mxu0 0.0
        %1273 = vmatprep.subr.mxu0 0.0
        %1274 = vmatpush1.msra.mxu0 0.0
        %1275 = vmatprep.subr.mxu0 0.0
        %1276 = vmatpush1.msra.mxu0 0.0
        %1277 = vmatprep.subr.mxu0 0.0
        %1278 = vmatpush1.msra.mxu0 0.0
        %1279 = vmatprep.subr.mxu0 0.0
        %1280 = vmatpush1.msra.mxu0 0.0
        %1281 = vmatprep.subr.mxu0 0.0
        %1282 = vmatpush1.msra.mxu0 0.0
        %1283 = vmatprep.subr.mxu0 0.0
        %1284 = vmatpush1.msra.mxu0 0.0
        %1285 = vmatprep.subr.mxu0 0.0
        %1286 = vmatpush1.msra.mxu0 0.0
        %1287 = vmatprep.subr.mxu0 0.0
        %1288 = vmatpush1.msra.mxu0 0.0
        %1289 = vmatprep.subr.mxu0 0.0
        %1290 = vmatpush1.msra.mxu0 0.0
        %1291 = vmatprep.subr.mxu0 0.0
        %1292 = vmatpush1.msra.mxu0 0.0
        %1293 = vmatprep.subr.mxu0 0.0
        %1294 = vmatpush1.msra.mxu0 0.0
        %1295 = vmatprep.subr.mxu0 0.0
        %1296 = vmatpush1.msra.mxu0 0.0
        %1297 = vmatprep.subr.mxu0 0.0
        %1298 = vmatpush1.msra.mxu0 0.0
        %1299 = vmatprep.subr.mxu0 0.0
        %1300 = vmatpush1.msra.mxu0 0.0
        %1301 = vmatprep.subr.mxu0 0.0
        %1302 = vmatpush1.msra.mxu0 0.0
        %1303 = vmatprep.subr.mxu0 0.0
        %1304 = vmatpush1.msra.mxu0 0.0
        %1305 = vmatprep.subr.mxu0 0.0
        %1306 = vmatpush1.msra.mxu0 0.0
        %1307 = vmatprep.subr.mxu0 0.0
        %1308 = vmatpush1.msra.mxu0 0.0
        %1309 = vmatprep.subr.mxu0 0.0
        %1310 = vmatpush1.msra.mxu0 0.0
        %1311 = vmatprep.subr.mxu0 0.0
        %1312 = vmatpush1.msra.mxu0 0.0
        %1313 = vmatprep.subr.mxu0 0.0
        %1314 = vmatpush1.msra.mxu0 0.0
        %1315 = vmatprep.mubr.f32.mxu0 0.0
        %1316 = vmatmul.mubr.f32.gmra.mrb[0].mxu0 %v1249
        %v1317 = vpop.f32.mrb[0].mxu0
        %v1318 = vadd.f32 0.0, %v1317
        %v1319 = vpop.f32.mrb[0].mxu0
        %v1320 = vadd.f32 0.0, %v1319
        %1321 = vdwg.mxu0
        %1322 = vmatprep.subr.mxu0 %v1243
        %1323 = vmatpush1.msra.mxu0 %v1242
        %1324 = vmatprep.subr.mxu0 0.0
        %1325 = vmatpush1.msra.mxu0 0.0
        %1326 = vmatprep.subr.mxu0 0.0
        %1327 = vmatpush1.msra.mxu0 0.0
        %1328 = vmatprep.subr.mxu0 0.0
        %1329 = vmatpush1.msra.mxu0 0.0
        %1330 = vmatprep.subr.mxu0 0.0
        %1331 = vmatpush1.msra.mxu0 0.0
        %1332 = vmatprep.subr.mxu0 0.0
        %1333 = vmatpush1.msra.mxu0 0.0
        %1334 = vmatprep.subr.mxu0 0.0
        %1335 = vmatpush1.msra.mxu0 0.0
        %1336 = vmatprep.subr.mxu0 0.0
        %1337 = vmatpush1.msra.mxu0 0.0
        %1338 = vmatprep.subr.mxu0 0.0
        %1339 = vmatpush1.msra.mxu0 0.0
        %1340 = vmatprep.subr.mxu0 0.0
        %1341 = vmatpush1.msra.mxu0 0.0
        %1342 = vmatprep.subr.mxu0 0.0
        %1343 = vmatpush1.msra.mxu0 0.0
        %1344 = vmatprep.subr.mxu0 0.0
        %1345 = vmatpush1.msra.mxu0 0.0
        %1346 = vmatprep.subr.mxu0 0.0
        %1347 = vmatpush1.msra.mxu0 0.0
        %1348 = vmatprep.subr.mxu0 0.0
        %1349 = vmatpush1.msra.mxu0 0.0
        %1350 = vmatprep.subr.mxu0 0.0
        %1351 = vmatpush1.msra.mxu0 0.0
        %1352 = vmatprep.subr.mxu0 0.0
        %1353 = vmatpush1.msra.mxu0 0.0
        %1354 = vmatprep.subr.mxu0 0.0
        %1355 = vmatpush1.msra.mxu0 0.0
        %1356 = vmatprep.subr.mxu0 0.0
        %1357 = vmatpush1.msra.mxu0 0.0
        %1358 = vmatprep.subr.mxu0 0.0
        %1359 = vmatpush1.msra.mxu0 0.0
        %1360 = vmatprep.subr.mxu0 0.0
        %1361 = vmatpush1.msra.mxu0 0.0
        %1362 = vmatprep.subr.mxu0 0.0
        %1363 = vmatpush1.msra.mxu0 0.0
        %1364 = vmatprep.subr.mxu0 0.0
        %1365 = vmatpush1.msra.mxu0 0.0
        %1366 = vmatprep.subr.mxu0 0.0
        %1367 = vmatpush1.msra.mxu0 0.0
        %1368 = vmatprep.subr.mxu0 0.0
        %1369 = vmatpush1.msra.mxu0 0.0
        %1370 = vmatprep.subr.mxu0 0.0
        %1371 = vmatpush1.msra.mxu0 0.0
        %1372 = vmatprep.subr.mxu0 0.0
        %1373 = vmatpush1.msra.mxu0 0.0
        %1374 = vmatprep.subr.mxu0 0.0
        %1375 = vmatpush1.msra.mxu0 0.0
        %1376 = vmatprep.subr.mxu0 0.0
        %1377 = vmatpush1.msra.mxu0 0.0
        %1378 = vmatprep.subr.mxu0 0.0
        %1379 = vmatpush1.msra.mxu0 0.0
        %1380 = vmatprep.subr.mxu0 0.0
        %1381 = vmatpush1.msra.mxu0 0.0
        %1382 = vmatprep.subr.mxu0 0.0
        %1383 = vmatpush1.msra.mxu0 0.0
        %1384 = vmatprep.subr.mxu0 0.0
        %1385 = vmatpush1.msra.mxu0 0.0
        %1386 = vmatprep.mubr.f32.mxu0 0.0
        %1387 = vmatmul.mubr.f32.gmra.mrb[0].mxu0 %v1249
        %v1388 = vpop.f32.mrb[0].mxu0
        %v1389 = vadd.f32 0.0, %v1388
        %v1390 = vpop.f32.mrb[0].mxu0
        %v1391 = vadd.f32 0.0, %v1390
        %1392 = vdwg.mxu0
        %v1393 = vld [vmem:[#allocation3] sm:$0xff]
        %v1394 = vld [vmem:[#allocation3 + $0x8] sm:$0xff]
        %v1395 = vld [vmem:[#allocation3 + $0x10] sm:$0xff]
        %v1396 = vld [vmem:[#allocation3 + $0x18] sm:$0xff]
        %v1397 = vadd.f32 %v1393, %v1318
        %v1398 = vadd.f32 %v1394, %v1320
        %v1399 = vadd.f32 %v1395, %v1389
        %v1400 = vadd.f32 %v1396, %v1391
        %1401 = vst [vmem:[#allocation3] sm:$0xff] %v1397
        %1402 = vst [vmem:[#allocation3 + $0x8] sm:$0xff] %v1398
        %1403 = vst [vmem:[#allocation3 + $0x10] sm:$0xff] %v1399
        %1404 = vst [vmem:[#allocation3 + $0x18] sm:$0xff] %v1400
        %v1405 = vld [vmem:[#allocation2] sm:$0xff]
        %v1406 = vld [vmem:[#allocation2 + $0x8] sm:$0xff]
        %v1407 = vld [vmem:[#allocation2 + $0x10] sm:$0xff]
        %v1408 = vld [vmem:[#allocation2 + $0x18] sm:$0xff]
        %v1409 = vld [vmem:[#allocation2 + $0x20] sm:$0xff]
        %s1410 = scalar_lea.vmem %s2, 48
        %v1411 = vld [vmem:[%s1410] sm:$0xff]
        %1417 = vrot.lane.b32.xlu0 %v1405, 64
        %v1418 = vpop.permute.xlu0 %1417
        %1419 = vrot.lane.b32.xlu0 %v1406, 64
        %v1420 = vpop.permute.xlu0 %1419
        %1421 = vrot.lane.b32.xlu0 %v1407, 64
        %v1422 = vpop.permute.xlu0 %1421
        %1423 = vrot.lane.b32.xlu0 %v1408, 64
        %v1424 = vpop.permute.xlu0 %1423
        %1425 = vrot.lane.b32.xlu0 %v1409, 64
        %v1426 = vpop.permute.xlu0 %1425
        %vm1427 = vcmask 523264
        %v1428 = vsel %vm1427, %v1418, %v1420
        %v1429 = vsel %vm1427, %v1420, %v1422
        %v1430 = vsel %vm1427, %v1422, %v1424
        %v1431 = vsel %vm1427, %v1424, %v1426
        %v1437 = vsel %vm315, %v1411, 0
        %1439 = vmatprep.subr.mxu0 %v1429
        %1440 = vmatpush1.msra.mxu0 %v1428
        %1441 = vmatprep.subr.mxu0 0.0
        %1442 = vmatpush1.msra.mxu0 0.0
        %1443 = vmatprep.subr.mxu0 0.0
        %1444 = vmatpush1.msra.mxu0 0.0
        %1445 = vmatprep.subr.mxu0 0.0
        %1446 = vmatpush1.msra.mxu0 0.0
        %1447 = vmatprep.subr.mxu0 0.0
        %1448 = vmatpush1.msra.mxu0 0.0
        %1449 = vmatprep.subr.mxu0 0.0
        %1450 = vmatpush1.msra.mxu0 0.0
        %1451 = vmatprep.subr.mxu0 0.0
        %1452 = vmatpush1.msra.mxu0 0.0
        %1453 = vmatprep.subr.mxu0 0.0
        %1454 = vmatpush1.msra.mxu0 0.0
        %1455 = vmatprep.subr.mxu0 0.0
        %1456 = vmatpush1.msra.mxu0 0.0
        %1457 = vmatprep.subr.mxu0 0.0
        %1458 = vmatpush1.msra.mxu0 0.0
        %1459 = vmatprep.subr.mxu0 0.0
        %1460 = vmatpush1.msra.mxu0 0.0
        %1461 = vmatprep.subr.mxu0 0.0
        %1462 = vmatpush1.msra.mxu0 0.0
        %1463 = vmatprep.subr.mxu0 0.0
        %1464 = vmatpush1.msra.mxu0 0.0
        %1465 = vmatprep.subr.mxu0 0.0
        %1466 = vmatpush1.msra.mxu0 0.0
        %1467 = vmatprep.subr.mxu0 0.0
        %1468 = vmatpush1.msra.mxu0 0.0
        %1469 = vmatprep.subr.mxu0 0.0
        %1470 = vmatpush1.msra.mxu0 0.0
        %1471 = vmatprep.subr.mxu0 0.0
        %1472 = vmatpush1.msra.mxu0 0.0
        %1473 = vmatprep.subr.mxu0 0.0
        %1474 = vmatpush1.msra.mxu0 0.0
        %1475 = vmatprep.subr.mxu0 0.0
        %1476 = vmatpush1.msra.mxu0 0.0
        %1477 = vmatprep.subr.mxu0 0.0
        %1478 = vmatpush1.msra.mxu0 0.0
        %1479 = vmatprep.subr.mxu0 0.0
        %1480 = vmatpush1.msra.mxu0 0.0
        %1481 = vmatprep.subr.mxu0 0.0
        %1482 = vmatpush1.msra.mxu0 0.0
        %1483 = vmatprep.subr.mxu0 0.0
        %1484 = vmatpush1.msra.mxu0 0.0
        %1485 = vmatprep.subr.mxu0 0.0
        %1486 = vmatpush1.msra.mxu0 0.0
        %1487 = vmatprep.subr.mxu0 0.0
        %1488 = vmatpush1.msra.mxu0 0.0
        %1489 = vmatprep.subr.mxu0 0.0
        %1490 = vmatpush1.msra.mxu0 0.0
        %1491 = vmatprep.subr.mxu0 0.0
        %1492 = vmatpush1.msra.mxu0 0.0
        %1493 = vmatprep.subr.mxu0 0.0
        %1494 = vmatpush1.msra.mxu0 0.0
        %1495 = vmatprep.subr.mxu0 0.0
        %1496 = vmatpush1.msra.mxu0 0.0
        %1497 = vmatprep.subr.mxu0 0.0
        %1498 = vmatpush1.msra.mxu0 0.0
        %1499 = vmatprep.subr.mxu0 0.0
        %1500 = vmatpush1.msra.mxu0 0.0
        %1501 = vmatprep.subr.mxu0 0.0
        %1502 = vmatpush1.msra.mxu0 0.0
        %1503 = vmatprep.mubr.f32.mxu0 0.0
        %1504 = vmatmul.mubr.f32.gmra.mrb[0].mxu0 %v1437
        %v1505 = vpop.f32.mrb[0].mxu0
        %v1506 = vadd.f32 0.0, %v1505
        %v1507 = vpop.f32.mrb[0].mxu0
        %v1508 = vadd.f32 0.0, %v1507
        %1509 = vdwg.mxu0
        %1510 = vmatprep.subr.mxu0 %v1431
        %1511 = vmatpush1.msra.mxu0 %v1430
        %1512 = vmatprep.subr.mxu0 0.0
        %1513 = vmatpush1.msra.mxu0 0.0
        %1514 = vmatprep.subr.mxu0 0.0
        %1515 = vmatpush1.msra.mxu0 0.0
        %1516 = vmatprep.subr.mxu0 0.0
        %1517 = vmatpush1.msra.mxu0 0.0
        %1518 = vmatprep.subr.mxu0 0.0
        %1519 = vmatpush1.msra.mxu0 0.0
        %1520 = vmatprep.subr.mxu0 0.0
        %1521 = vmatpush1.msra.mxu0 0.0
        %1522 = vmatprep.subr.mxu0 0.0
        %1523 = vmatpush1.msra.mxu0 0.0
        %1524 = vmatprep.subr.mxu0 0.0
        %1525 = vmatpush1.msra.mxu0 0.0
        %1526 = vmatprep.subr.mxu0 0.0
        %1527 = vmatpush1.msra.mxu0 0.0
        %1528 = vmatprep.subr.mxu0 0.0
        %1529 = vmatpush1.msra.mxu0 0.0
        %1530 = vmatprep.subr.mxu0 0.0
        %1531 = vmatpush1.msra.mxu0 0.0
        %1532 = vmatprep.subr.mxu0 0.0
        %1533 = vmatpush1.msra.mxu0 0.0
        %1534 = vmatprep.subr.mxu0 0.0
        %1535 = vmatpush1.msra.mxu0 0.0
        %1536 = vmatprep.subr.mxu0 0.0
        %1537 = vmatpush1.msra.mxu0 0.0
        %1538 = vmatprep.subr.mxu0 0.0
        %1539 = vmatpush1.msra.mxu0 0.0
        %1540 = vmatprep.subr.mxu0 0.0
        %1541 = vmatpush1.msra.mxu0 0.0
        %1542 = vmatprep.subr.mxu0 0.0
        %1543 = vmatpush1.msra.mxu0 0.0
        %1544 = vmatprep.subr.mxu0 0.0
        %1545 = vmatpush1.msra.mxu0 0.0
        %1546 = vmatprep.subr.mxu0 0.0
        %1547 = vmatpush1.msra.mxu0 0.0
        %1548 = vmatprep.subr.mxu0 0.0
        %1549 = vmatpush1.msra.mxu0 0.0
        %1550 = vmatprep.subr.mxu0 0.0
        %1551 = vmatpush1.msra.mxu0 0.0
        %1552 = vmatprep.subr.mxu0 0.0
        %1553 = vmatpush1.msra.mxu0 0.0
        %1554 = vmatprep.subr.mxu0 0.0
        %1555 = vmatpush1.msra.mxu0 0.0
        %1556 = vmatprep.subr.mxu0 0.0
        %1557 = vmatpush1.msra.mxu0 0.0
        %1558 = vmatprep.subr.mxu0 0.0
        %1559 = vmatpush1.msra.mxu0 0.0
        %1560 = vmatprep.subr.mxu0 0.0
        %1561 = vmatpush1.msra.mxu0 0.0
        %1562 = vmatprep.subr.mxu0 0.0
        %1563 = vmatpush1.msra.mxu0 0.0
        %1564 = vmatprep.subr.mxu0 0.0
        %1565 = vmatpush1.msra.mxu0 0.0
        %1566 = vmatprep.subr.mxu0 0.0
        %1567 = vmatpush1.msra.mxu0 0.0
        %1568 = vmatprep.subr.mxu0 0.0
        %1569 = vmatpush1.msra.mxu0 0.0
        %1570 = vmatprep.subr.mxu0 0.0
        %1571 = vmatpush1.msra.mxu0 0.0
        %1572 = vmatprep.subr.mxu0 0.0
        %1573 = vmatpush1.msra.mxu0 0.0
        %1574 = vmatprep.mubr.f32.mxu0 0.0
        %1575 = vmatmul.mubr.f32.gmra.mrb[0].mxu0 %v1437
        %v1576 = vpop.f32.mrb[0].mxu0
        %v1577 = vadd.f32 0.0, %v1576
        %v1578 = vpop.f32.mrb[0].mxu0
        %v1579 = vadd.f32 0.0, %v1578
        %1580 = vdwg.mxu0
        %v1581 = vld [vmem:[#allocation3] sm:$0xff]
        %v1582 = vld [vmem:[#allocation3 + $0x8] sm:$0xff]
        %v1583 = vld [vmem:[#allocation3 + $0x10] sm:$0xff]
        %v1584 = vld [vmem:[#allocation3 + $0x18] sm:$0xff]
        %v1585 = vadd.f32 %v1581, %v1506
        %v1586 = vadd.f32 %v1582, %v1508
        %v1587 = vadd.f32 %v1583, %v1577
        %v1588 = vadd.f32 %v1584, %v1579
        %1589 = vst [vmem:[#allocation3] sm:$0xff] %v1585
        %1590 = vst [vmem:[#allocation3 + $0x8] sm:$0xff] %v1586
        %1591 = vst [vmem:[#allocation3 + $0x10] sm:$0xff] %v1587
        %1592 = vst [vmem:[#allocation3 + $0x18] sm:$0xff] %v1588
        %v1593 = vld [vmem:[#allocation2] sm:$0xff]
        %v1594 = vld [vmem:[#allocation2 + $0x8] sm:$0xff]
        %v1595 = vld [vmem:[#allocation2 + $0x10] sm:$0xff]
        %v1596 = vld [vmem:[#allocation2 + $0x18] sm:$0xff]
        %v1597 = vld [vmem:[#allocation2 + $0x20] sm:$0xff]
        %s1598 = scalar_lea.vmem %s2, 56
        %v1599 = vld [vmem:[%s1598] sm:$0xff]
        %1605 = vrot.lane.b32.xlu0 %v1593, 63
        %v1606 = vpop.permute.xlu0 %1605
        %1607 = vrot.lane.b32.xlu0 %v1594, 63
        %v1608 = vpop.permute.xlu0 %1607
        %1609 = vrot.lane.b32.xlu0 %v1595, 63
        %v1610 = vpop.permute.xlu0 %1609
        %1611 = vrot.lane.b32.xlu0 %v1596, 63
        %v1612 = vpop.permute.xlu0 %1611
        %1613 = vrot.lane.b32.xlu0 %v1597, 63
        %v1614 = vpop.permute.xlu0 %1613
        %vm1615 = vcmask 515072
        %v1616 = vsel %vm1615, %v1606, %v1608
        %v1617 = vsel %vm1615, %v1608, %v1610
        %v1618 = vsel %vm1615, %v1610, %v1612
        %v1619 = vsel %vm1615, %v1612, %v1614
        %v1625 = vsel %vm315, %v1599, 0
        %1627 = vmatprep.subr.mxu0 %v1617
        %1628 = vmatpush1.msra.mxu0 %v1616
        %1629 = vmatprep.subr.mxu0 0.0
        %1630 = vmatpush1.msra.mxu0 0.0
        %1631 = vmatprep.subr.mxu0 0.0
        %1632 = vmatpush1.msra.mxu0 0.0
        %1633 = vmatprep.subr.mxu0 0.0
        %1634 = vmatpush1.msra.mxu0 0.0
        %1635 = vmatprep.subr.mxu0 0.0
        %1636 = vmatpush1.msra.mxu0 0.0
        %1637 = vmatprep.subr.mxu0 0.0
        %1638 = vmatpush1.msra.mxu0 0.0
        %1639 = vmatprep.subr.mxu0 0.0
        %1640 = vmatpush1.msra.mxu0 0.0
        %1641 = vmatprep.subr.mxu0 0.0
        %1642 = vmatpush1.msra.mxu0 0.0
        %1643 = vmatprep.subr.mxu0 0.0
        %1644 = vmatpush1.msra.mxu0 0.0
        %1645 = vmatprep.subr.mxu0 0.0
        %1646 = vmatpush1.msra.mxu0 0.0
        %1647 = vmatprep.subr.mxu0 0.0
        %1648 = vmatpush1.msra.mxu0 0.0
        %1649 = vmatprep.subr.mxu0 0.0
        %1650 = vmatpush1.msra.mxu0 0.0
        %1651 = vmatprep.subr.mxu0 0.0
        %1652 = vmatpush1.msra.mxu0 0.0
        %1653 = vmatprep.subr.mxu0 0.0
        %1654 = vmatpush1.msra.mxu0 0.0
        %1655 = vmatprep.subr.mxu0 0.0
        %1656 = vmatpush1.msra.mxu0 0.0
        %1657 = vmatprep.subr.mxu0 0.0
        %1658 = vmatpush1.msra.mxu0 0.0
        %1659 = vmatprep.subr.mxu0 0.0
        %1660 = vmatpush1.msra.mxu0 0.0
        %1661 = vmatprep.subr.mxu0 0.0
        %1662 = vmatpush1.msra.mxu0 0.0
        %1663 = vmatprep.subr.mxu0 0.0
        %1664 = vmatpush1.msra.mxu0 0.0
        %1665 = vmatprep.subr.mxu0 0.0
        %1666 = vmatpush1.msra.mxu0 0.0
        %1667 = vmatprep.subr.mxu0 0.0
        %1668 = vmatpush1.msra.mxu0 0.0
        %1669 = vmatprep.subr.mxu0 0.0
        %1670 = vmatpush1.msra.mxu0 0.0
        %1671 = vmatprep.subr.mxu0 0.0
        %1672 = vmatpush1.msra.mxu0 0.0
        %1673 = vmatprep.subr.mxu0 0.0
        %1674 = vmatpush1.msra.mxu0 0.0
        %1675 = vmatprep.subr.mxu0 0.0
        %1676 = vmatpush1.msra.mxu0 0.0
        %1677 = vmatprep.subr.mxu0 0.0
        %1678 = vmatpush1.msra.mxu0 0.0
        %1679 = vmatprep.subr.mxu0 0.0
        %1680 = vmatpush1.msra.mxu0 0.0
        %1681 = vmatprep.subr.mxu0 0.0
        %1682 = vmatpush1.msra.mxu0 0.0
        %1683 = vmatprep.subr.mxu0 0.0
        %1684 = vmatpush1.msra.mxu0 0.0
        %1685 = vmatprep.subr.mxu0 0.0
        %1686 = vmatpush1.msra.mxu0 0.0
        %1687 = vmatprep.subr.mxu0 0.0
        %1688 = vmatpush1.msra.mxu0 0.0
        %1689 = vmatprep.subr.mxu0 0.0
        %1690 = vmatpush1.msra.mxu0 0.0
        %1691 = vmatprep.mubr.f32.mxu0 0.0
        %1692 = vmatmul.mubr.f32.gmra.mrb[0].mxu0 %v1625
        %v1693 = vpop.f32.mrb[0].mxu0
        %v1694 = vadd.f32 0.0, %v1693
        %v1695 = vpop.f32.mrb[0].mxu0
        %v1696 = vadd.f32 0.0, %v1695
        %1697 = vdwg.mxu0
        %1698 = vmatprep.subr.mxu0 %v1619
        %1699 = vmatpush1.msra.mxu0 %v1618
        %1700 = vmatprep.subr.mxu0 0.0
        %1701 = vmatpush1.msra.mxu0 0.0
        %1702 = vmatprep.subr.mxu0 0.0
        %1703 = vmatpush1.msra.mxu0 0.0
        %1704 = vmatprep.subr.mxu0 0.0
        %1705 = vmatpush1.msra.mxu0 0.0
        %1706 = vmatprep.subr.mxu0 0.0
        %1707 = vmatpush1.msra.mxu0 0.0
        %1708 = vmatprep.subr.mxu0 0.0
        %1709 = vmatpush1.msra.mxu0 0.0
        %1710 = vmatprep.subr.mxu0 0.0
        %1711 = vmatpush1.msra.mxu0 0.0
        %1712 = vmatprep.subr.mxu0 0.0
        %1713 = vmatpush1.msra.mxu0 0.0
        %1714 = vmatprep.subr.mxu0 0.0
        %1715 = vmatpush1.msra.mxu0 0.0
        %1716 = vmatprep.subr.mxu0 0.0
        %1717 = vmatpush1.msra.mxu0 0.0
        %1718 = vmatprep.subr.mxu0 0.0
        %1719 = vmatpush1.msra.mxu0 0.0
        %1720 = vmatprep.subr.mxu0 0.0
        %1721 = vmatpush1.msra.mxu0 0.0
        %1722 = vmatprep.subr.mxu0 0.0
        %1723 = vmatpush1.msra.mxu0 0.0
        %1724 = vmatprep.subr.mxu0 0.0
        %1725 = vmatpush1.msra.mxu0 0.0
        %1726 = vmatprep.subr.mxu0 0.0
        %1727 = vmatpush1.msra.mxu0 0.0
        %1728 = vmatprep.subr.mxu0 0.0
        %1729 = vmatpush1.msra.mxu0 0.0
        %1730 = vmatprep.subr.mxu0 0.0
        %1731 = vmatpush1.msra.mxu0 0.0
        %1732 = vmatprep.subr.mxu0 0.0
        %1733 = vmatpush1.msra.mxu0 0.0
        %1734 = vmatprep.subr.mxu0 0.0
        %1735 = vmatpush1.msra.mxu0 0.0
        %1736 = vmatprep.subr.mxu0 0.0
        %1737 = vmatpush1.msra.mxu0 0.0
        %1738 = vmatprep.subr.mxu0 0.0
        %1739 = vmatpush1.msra.mxu0 0.0
        %1740 = vmatprep.subr.mxu0 0.0
        %1741 = vmatpush1.msra.mxu0 0.0
        %1742 = vmatprep.subr.mxu0 0.0
        %1743 = vmatpush1.msra.mxu0 0.0
        %1744 = vmatprep.subr.mxu0 0.0
        %1745 = vmatpush1.msra.mxu0 0.0
        %1746 = vmatprep.subr.mxu0 0.0
        %1747 = vmatpush1.msra.mxu0 0.0
        %1748 = vmatprep.subr.mxu0 0.0
        %1749 = vmatpush1.msra.mxu0 0.0
        %1750 = vmatprep.subr.mxu0 0.0
        %1751 = vmatpush1.msra.mxu0 0.0
        %1752 = vmatprep.subr.mxu0 0.0
        %1753 = vmatpush1.msra.mxu0 0.0
        %1754 = vmatprep.subr.mxu0 0.0
        %1755 = vmatpush1.msra.mxu0 0.0
        %1756 = vmatprep.subr.mxu0 0.0
        %1757 = vmatpush1.msra.mxu0 0.0
        %1758 = vmatprep.subr.mxu0 0.0
        %1759 = vmatpush1.msra.mxu0 0.0
        %1760 = vmatprep.subr.mxu0 0.0
        %1761 = vmatpush1.msra.mxu0 0.0
        %1762 = vmatprep.mubr.f32.mxu0 0.0
        %1763 = vmatmul.mubr.f32.gmra.mrb[0].mxu0 %v1625
        %v1764 = vpop.f32.mrb[0].mxu0
        %v1765 = vadd.f32 0.0, %v1764
        %v1766 = vpop.f32.mrb[0].mxu0
        %v1767 = vadd.f32 0.0, %v1766
        %1768 = vdwg.mxu0
        %v1769 = vld [vmem:[#allocation3] sm:$0xff]
        %v1770 = vld [vmem:[#allocation3 + $0x8] sm:$0xff]
        %v1771 = vld [vmem:[#allocation3 + $0x10] sm:$0xff]
        %v1772 = vld [vmem:[#allocation3 + $0x18] sm:$0xff]
        %v1773 = vadd.f32 %v1769, %v1694
        %v1774 = vadd.f32 %v1770, %v1696
        %v1775 = vadd.f32 %v1771, %v1765
        %v1776 = vadd.f32 %v1772, %v1767
        %1777 = vst [vmem:[#allocation3] sm:$0xff] %v1773
        %1778 = vst [vmem:[#allocation3 + $0x8] sm:$0xff] %v1774
        %1779 = vst [vmem:[#allocation3 + $0x10] sm:$0xff] %v1775
        %1780 = vst [vmem:[#allocation3 + $0x18] sm:$0xff] %v1776
        %v1781 = vld [vmem:[#allocation2] sm:$0xff]
        %v1782 = vld [vmem:[#allocation2 + $0x8] sm:$0xff]
        %v1783 = vld [vmem:[#allocation2 + $0x10] sm:$0xff]
        %v1784 = vld [vmem:[#allocation2 + $0x18] sm:$0xff]
        %v1785 = vld [vmem:[#allocation2 + $0x20] sm:$0xff]
        %s1786 = scalar_lea.vmem %s2, 64
        %v1787 = vld [vmem:[%s1786] sm:$0xff]
        %1793 = vrot.lane.b32.xlu0 %v1781, 62
        %v1794 = vpop.permute.xlu0 %1793
        %1795 = vrot.lane.b32.xlu0 %v1782, 62
        %v1796 = vpop.permute.xlu0 %1795
        %1797 = vrot.lane.b32.xlu0 %v1783, 62
        %v1798 = vpop.permute.xlu0 %1797
        %1799 = vrot.lane.b32.xlu0 %v1784, 62
        %v1800 = vpop.permute.xlu0 %1799
        %1801 = vrot.lane.b32.xlu0 %v1785, 62
        %v1802 = vpop.permute.xlu0 %1801
        %vm1803 = vcmask 506880
        %v1804 = vsel %vm1803, %v1794, %v1796
        %v1805 = vsel %vm1803, %v1796, %v1798
        %v1806 = vsel %vm1803, %v1798, %v1800
        %v1807 = vsel %vm1803, %v1800, %v1802
        %v1813 = vsel %vm315, %v1787, 0
        %1815 = vmatprep.subr.mxu0 %v1805
        %1816 = vmatpush1.msra.mxu0 %v1804
        %1817 = vmatprep.subr.mxu0 0.0
        %1818 = vmatpush1.msra.mxu0 0.0
        %1819 = vmatprep.subr.mxu0 0.0
        %1820 = vmatpush1.msra.mxu0 0.0
        %1821 = vmatprep.subr.mxu0 0.0
        %1822 = vmatpush1.msra.mxu0 0.0
        %1823 = vmatprep.subr.mxu0 0.0
        %1824 = vmatpush1.msra.mxu0 0.0
        %1825 = vmatprep.subr.mxu0 0.0
        %1826 = vmatpush1.msra.mxu0 0.0
        %1827 = vmatprep.subr.mxu0 0.0
        %1828 = vmatpush1.msra.mxu0 0.0
        %1829 = vmatprep.subr.mxu0 0.0
        %1830 = vmatpush1.msra.mxu0 0.0
        %1831 = vmatprep.subr.mxu0 0.0
        %1832 = vmatpush1.msra.mxu0 0.0
        %1833 = vmatprep.subr.mxu0 0.0
        %1834 = vmatpush1.msra.mxu0 0.0
        %1835 = vmatprep.subr.mxu0 0.0
        %1836 = vmatpush1.msra.mxu0 0.0
        %1837 = vmatprep.subr.mxu0 0.0
        %1838 = vmatpush1.msra.mxu0 0.0
        %1839 = vmatprep.subr.mxu0 0.0
        %1840 = vmatpush1.msra.mxu0 0.0
        %1841 = vmatprep.subr.mxu0 0.0
        %1842 = vmatpush1.msra.mxu0 0.0
        %1843 = vmatprep.subr.mxu0 0.0
        %1844 = vmatpush1.msra.mxu0 0.0
        %1845 = vmatprep.subr.mxu0 0.0
        %1846 = vmatpush1.msra.mxu0 0.0
        %1847 = vmatprep.subr.mxu0 0.0
        %1848 = vmatpush1.msra.mxu0 0.0
        %1849 = vmatprep.subr.mxu0 0.0
        %1850 = vmatpush1.msra.mxu0 0.0
        %1851 = vmatprep.subr.mxu0 0.0
        %1852 = vmatpush1.msra.mxu0 0.0
        %1853 = vmatprep.subr.mxu0 0.0
        %1854 = vmatpush1.msra.mxu0 0.0
        %1855 = vmatprep.subr.mxu0 0.0
        %1856 = vmatpush1.msra.mxu0 0.0
        %1857 = vmatprep.subr.mxu0 0.0
        %1858 = vmatpush1.msra.mxu0 0.0
        %1859 = vmatprep.subr.mxu0 0.0
        %1860 = vmatpush1.msra.mxu0 0.0
        %1861 = vmatprep.subr.mxu0 0.0
        %1862 = vmatpush1.msra.mxu0 0.0
        %1863 = vmatprep.subr.mxu0 0.0
        %1864 = vmatpush1.msra.mxu0 0.0
        %1865 = vmatprep.subr.mxu0 0.0
        %1866 = vmatpush1.msra.mxu0 0.0
        %1867 = vmatprep.subr.mxu0 0.0
        %1868 = vmatpush1.msra.mxu0 0.0
        %1869 = vmatprep.subr.mxu0 0.0
        %1870 = vmatpush1.msra.mxu0 0.0
        %1871 = vmatprep.subr.mxu0 0.0
        %1872 = vmatpush1.msra.mxu0 0.0
        %1873 = vmatprep.subr.mxu0 0.0
        %1874 = vmatpush1.msra.mxu0 0.0
        %1875 = vmatprep.subr.mxu0 0.0
        %1876 = vmatpush1.msra.mxu0 0.0
        %1877 = vmatprep.subr.mxu0 0.0
        %1878 = vmatpush1.msra.mxu0 0.0
        %1879 = vmatprep.mubr.f32.mxu0 0.0
        %1880 = vmatmul.mubr.f32.gmra.mrb[0].mxu0 %v1813
        %v1881 = vpop.f32.mrb[0].mxu0
        %v1882 = vadd.f32 0.0, %v1881
        %v1883 = vpop.f32.mrb[0].mxu0
        %v1884 = vadd.f32 0.0, %v1883
        %1885 = vdwg.mxu0
        %1886 = vmatprep.subr.mxu0 %v1807
        %1887 = vmatpush1.msra.mxu0 %v1806
        %1888 = vmatprep.subr.mxu0 0.0
        %1889 = vmatpush1.msra.mxu0 0.0
        %1890 = vmatprep.subr.mxu0 0.0
        %1891 = vmatpush1.msra.mxu0 0.0
        %1892 = vmatprep.subr.mxu0 0.0
        %1893 = vmatpush1.msra.mxu0 0.0
        %1894 = vmatprep.subr.mxu0 0.0
        %1895 = vmatpush1.msra.mxu0 0.0
        %1896 = vmatprep.subr.mxu0 0.0
        %1897 = vmatpush1.msra.mxu0 0.0
        %1898 = vmatprep.subr.mxu0 0.0
        %1899 = vmatpush1.msra.mxu0 0.0
        %1900 = vmatprep.subr.mxu0 0.0
        %1901 = vmatpush1.msra.mxu0 0.0
        %1902 = vmatprep.subr.mxu0 0.0
        %1903 = vmatpush1.msra.mxu0 0.0
        %1904 = vmatprep.subr.mxu0 0.0
        %1905 = vmatpush1.msra.mxu0 0.0
        %1906 = vmatprep.subr.mxu0 0.0
        %1907 = vmatpush1.msra.mxu0 0.0
        %1908 = vmatprep.subr.mxu0 0.0
        %1909 = vmatpush1.msra.mxu0 0.0
        %1910 = vmatprep.subr.mxu0 0.0
        %1911 = vmatpush1.msra.mxu0 0.0
        %1912 = vmatprep.subr.mxu0 0.0
        %1913 = vmatpush1.msra.mxu0 0.0
        %1914 = vmatprep.subr.mxu0 0.0
        %1915 = vmatpush1.msra.mxu0 0.0
        %1916 = vmatprep.subr.mxu0 0.0
        %1917 = vmatpush1.msra.mxu0 0.0
        %1918 = vmatprep.subr.mxu0 0.0
        %1919 = vmatpush1.msra.mxu0 0.0
        %1920 = vmatprep.subr.mxu0 0.0
        %1921 = vmatpush1.msra.mxu0 0.0
        %1922 = vmatprep.subr.mxu0 0.0
        %1923 = vmatpush1.msra.mxu0 0.0
        %1924 = vmatprep.subr.mxu0 0.0
        %1925 = vmatpush1.msra.mxu0 0.0
        %1926 = vmatprep.subr.mxu0 0.0
        %1927 = vmatpush1.msra.mxu0 0.0
        %1928 = vmatprep.subr.mxu0 0.0
        %1929 = vmatpush1.msra.mxu0 0.0
        %1930 = vmatprep.subr.mxu0 0.0
        %1931 = vmatpush1.msra.mxu0 0.0
        %1932 = vmatprep.subr.mxu0 0.0
        %1933 = vmatpush1.msra.mxu0 0.0
        %1934 = vmatprep.subr.mxu0 0.0
        %1935 = vmatpush1.msra.mxu0 0.0
        %1936 = vmatprep.subr.mxu0 0.0
        %1937 = vmatpush1.msra.mxu0 0.0
        %1938 = vmatprep.subr.mxu0 0.0
        %1939 = vmatpush1.msra.mxu0 0.0
        %1940 = vmatprep.subr.mxu0 0.0
        %1941 = vmatpush1.msra.mxu0 0.0
        %1942 = vmatprep.subr.mxu0 0.0
        %1943 = vmatpush1.msra.mxu0 0.0
        %1944 = vmatprep.subr.mxu0 0.0
        %1945 = vmatpush1.msra.mxu0 0.0
        %1946 = vmatprep.subr.mxu0 0.0
        %1947 = vmatpush1.msra.mxu0 0.0
        %1948 = vmatprep.subr.mxu0 0.0
        %1949 = vmatpush1.msra.mxu0 0.0
        %1950 = vmatprep.mubr.f32.mxu0 0.0
        %1951 = vmatmul.mubr.f32.gmra.mrb[0].mxu0 %v1813
        %v1952 = vpop.f32.mrb[0].mxu0
        %v1953 = vadd.f32 0.0, %v1952
        %v1954 = vpop.f32.mrb[0].mxu0
        %v1955 = vadd.f32 0.0, %v1954
        %1956 = vdwg.mxu0
        %v1957 = vld [vmem:[#allocation3] sm:$0xff]
        %v1958 = vld [vmem:[#allocation3 + $0x8] sm:$0xff]
        %v1959 = vld [vmem:[#allocation3 + $0x10] sm:$0xff]
        %v1960 = vld [vmem:[#allocation3 + $0x18] sm:$0xff]
        %v1961 = vadd.f32 %v1957, %v1882
        %v1962 = vadd.f32 %v1958, %v1884
        %v1963 = vadd.f32 %v1959, %v1953
        %v1964 = vadd.f32 %v1960, %v1955
        %1965 = vst [vmem:[#allocation3] sm:$0xff] %v1961
        %1966 = vst [vmem:[#allocation3 + $0x8] sm:$0xff] %v1962
        %1967 = vst [vmem:[#allocation3 + $0x10] sm:$0xff] %v1963
        %1968 = vst [vmem:[#allocation3 + $0x18] sm:$0xff] %v1964
        %v1969 = vld [vmem:[#allocation3] sm:$0xff]
        %v1970 = vld [vmem:[#allocation3 + $0x8] sm:$0xff]
        %v1971 = vld [vmem:[#allocation3 + $0x10] sm:$0xff]
        %v1972 = vld [vmem:[#allocation3 + $0x18] sm:$0xff]
        %v1973 = vld [vmem:[%s3] sm:$0xff]
        %1975 = vset.pattern.permute.xlu0 0
        %1976 = vperm.xlu0 %1975, %v1973
        %v1977 = vpop.permute.xlu0 %1976
        %v1979 = vadd.f32 %v1969, %v1977
        %v1980 = vadd.f32 %v1970, %v1977
        %v1981 = vadd.f32 %v1971, %v1977
        %v1982 = vadd.f32 %v1972, %v1977
        %1983 = vst [vmem:[%s275] sm:$0xff] %v1979
        %1984 = vst [vmem:[%s275 + $0x8] sm:$0xff] %v1980
        %1985 = vst [vmem:[%s275 + $0x10] sm:$0xff] %v1981
        %1986 = vst [vmem:[%s275 + $0x18] sm:$0xff] %v1982
        %s1987 = sand.u32 %s145, 1
        %s1988 = scalar_lea.sflag [#allocation6], %s1987
        %s1989 = sand.u32 %s145, 1
        %s1990 = smul.addr %s1989, 32
        %s1991 = scalar_lea.vmem [#allocation7], %s1990
        // Predicated region
        $region41: #{tpu_custom_call.1} parent=35 // pred_check
          %p1992 = pneg %p155
        $region42: #{tpu_custom_call.1} parent=35 // pred_check_branch
          %1994 = sbr.rel (%p1992) target = $region44
        $region43: #{tpu_custom_call.1} parent=35 // pred_region
          %s1995 = smul.u32 4, %s26
          %s1997 = ssub.s32 512, 512
          %1998 = vsyncadd %s1988, %s1997
          %s1999 = smul.addr %s25, 4
          %s2000 = sadd.s32 %s1995, %s1999
          %s2001 = smul.addr %s2000, 128
          %s2002 = scalar_lea.hbm %s4, %s2001
          %s2004 = sshll.u32 %s1991, 4
          %s2005 = int_to_ptr.vmem [resolvable:$true] %s2004
          %2007 = dma.vmem_to_hbm [thread:$0]  %s2005, 512, %s2002, %s1988
        $region44: #{tpu_custom_call.1} parent=35 // pred_fallthru
          _
      $region36: #{tpu_custom_call.1} parent=5 // pred_fallthru
        _
      %p2008 = scmp.le.s32.totalorder 2, %s16
      // Predicated region
      $region45: #{tpu_custom_call.1} parent=5 // pred_check
        %p2009 = pneg %p2008
      $region46: #{tpu_custom_call.1} parent=5 // pred_check_branch
        %2011 = sbr.rel (%p2009) target = $region48
      $region47: #{tpu_custom_call.1} parent=5 // pred_region
        %s2012 = ssub.s32 %s16, 2
        // Predicated region
        $region49: #{tpu_custom_call.1} parent=47 // pred_check
          %p2013 = pneg %p161
        $region50: #{tpu_custom_call.1} parent=47 // pred_check_branch
          %2015 = sbr.rel (%p2013) target = $region52
        $region51: #{tpu_custom_call.1} parent=47 // pred_region
          %s2016 = sand.u32 %s146, 1
          %s2017 = scalar_lea.sflag [#allocation6], %s2016
          %s2018 = sand.u32 %s146, 1
          %s2019 = smul.addr %s2018, 32
          %s2020 = scalar_lea.vmem [#allocation7], %s2019
          %2021 = dma.done %s2017, 512
        $region52: #{tpu_custom_call.1} parent=47 // pred_fallthru
          _
      $region48: #{tpu_custom_call.1} parent=5 // pred_fallthru
        _
    $region6: #{tpu_custom_call.1} parent=1 // loop_footer
      %s20 = sadd.s32 1, %s16
    $region7: #{tpu_custom_call.1} parent=1 // loop_footer_branch
      %15 = sbr.rel target = $region3
    $region8: #{tpu_custom_call.1} parent=1 // loop_exit
      _
    %2022 = vsyncpa [#allocation5], 1
    %s2023 = scalar_lea.sflag [#allocation5], 1
    %2024 = vsyncpa %s2023, 1
    %2025 = vsyncpa [#allocation6], 1
    %s2026 = scalar_lea.sflag [#allocation6], 1
    %2027 = vsyncpa %s2026, 1

</llo_original>
